<compile_context>
chip_gen: v6e
topology: v6e:2x2x1
jax: 0.10.0
libtpu: 0.0.40
codegen_flags: <defaults>
</compile_context>

<pallas_src>
import jax
import jax.numpy as jnp
from jax.experimental import pallas as pl
from jax.experimental.pallas import tpu as pltpu

_COLS = 512            # lane axis: large multiple of 128 -> unmasked vst
_MAX_TILE_ROWS = 2048  # 2048 x 512 x 4 B = 4 MiB per tile
_SMALL_N = 262_144     # below ~one tile's worth, jnp.arange beats a kernel launch
_VMEM_LIMIT = 48 * 1024 * 1024  # room for 2x output tile + 2x resident lin tile


def _round_up(x: int, m: int) -> int:
    return ((x + m - 1) // m) * m


def _arange_kernel(lin_ref, o_ref):
    # lin_ref: (tile_rows, _COLS) in-tile linear index, VMEM-resident
    #          (constant index_map -> DMA'd once, reused every grid step).
    # o_ref:   (tile_rows, _COLS) output block for grid step i.
    tile_rows, cols = lin_ref.shape
    # Scalar-unit base offset for this tile; the only thing that changes per step.
    base = pl.program_id(0) * (tile_rows * cols)
    # One VPU add per vreg; everything else is pure load/store.
    o_ref[...] = lin_ref[...] + base


def arange_for_fx(n: int) -> jax.Array:
    """Pallas equivalent of ArangeForFx().forward(n) == torch.arange(n)."""
    assert isinstance(n, int) and n >= 0, "arange bound must be a static Python int"
    if n < _SMALL_N:
        # Fast path: kernel launch + pipeline prologue is pure overhead here,
        # and XLA's iota fuses into downstream consumers.
        return jnp.arange(n, dtype=jnp.int32)

    rows = pl.cdiv(n, _COLS)
    rows_padded = _round_up(rows, 8)                   # sublane-aligned (<= 7 extra rows)
    tile_rows = min(_MAX_TILE_ROWS, rows_padded)
    num_tiles = pl.cdiv(rows_padded, tile_rows)        # ragged last tile clipped by Pallas
    tile_elems = tile_rows * _COLS

    # In-tile linear index, computed once on the XLA side (cheap iota) and kept
    # resident in VMEM across all grid steps via the constant index_map.
    lin = jnp.arange(tile_elems, dtype=jnp.int32).reshape(tile_rows, _COLS)

    out2d = pl.pallas_call(
        _arange_kernel,
        grid=(num_tiles,),
        in_specs=[pl.BlockSpec((tile_rows, _COLS), lambda i: (0, 0))],
        out_shape=jax.ShapeDtypeStruct((rows_padded, _COLS), jnp.int32),
        out_specs=pl.BlockSpec((tile_rows, _COLS), lambda i: (i, 0)),
        compiler_params=pltpu.CompilerParams(
            dimension_semantics=("parallel",),  # v7x: shard tiles across TCs
            vmem_limit_bytes=_VMEM_LIMIT,       # keep 4 MiB tiles legal on v5e
        ),
    )(lin)

    flat = out2d.reshape(-1)  # free bitcast (lane-contiguous slab)
    if n == rows_padded * _COLS:
        return flat           # exact fit: no trailing slice / extra HBM pass
    return flat[:n]


if __name__ == "__main__":
    # Deterministic harness; the op is purely index-generating, so no random
    # data is needed (key kept only for convention).
    key = jax.random.PRNGKey(0)
    del key

    # Small bound matching the module's typical use (seq=8): fast path.
    n_small = 8
    out_small = jax.block_until_ready(arange_for_fx(n_small))
    assert out_small.shape == (n_small,), out_small.shape
    assert out_small.dtype == jnp.int32, out_small.dtype
    assert bool(jnp.all(out_small == jnp.arange(n_small, dtype=jnp.int32)))

    # Exact-fit bound (multiple of 4096): single kernel tile, no trailing slice.
    n_exact = 4096 * 100  # 409600 -> rows_padded = 800, 1 tile of 800 rows
    out_exact = jax.block_until_ready(arange_for_fx(n_exact))
    assert out_exact.shape == (n_exact,), out_exact.shape
    assert out_exact.dtype == jnp.int32, out_exact.dtype
    assert int(out_exact[0]) == 0 and int(out_exact[-1]) == n_exact - 1
    assert bool(jnp.all(out_exact == jnp.arange(n_exact, dtype=jnp.int32)))

    # Larger bound exercising multiple tiles, a ragged (clipped) last tile,
    # and the trailing slice of the sublane padding.
    n_big = 512 * 5000 + 37  # 2560037 -> rows=5001, padded=5008 -> 3 tiles of 2048
    out_big = jax.block_until_ready(arange_for_fx(n_big))
    assert out_big.shape == (n_big,), out_big.shape
    assert out_big.dtype == jnp.int32, out_big.dtype
    assert int(out_big[0]) == 0
    assert int(out_big[-1]) == n_big - 1
    assert bool(jnp.all(out_big == jnp.arange(n_big, dtype=jnp.int32)))

    print("KERNEL_OK")
</pallas_src>

<mosaic_0001>
module attributes {stable_mosaic.version = 11 : i64} {
  func.func @_arange_kernel(%arg0: i32, %arg1: memref<800x512xi32, #tpu.memory_space<vmem>>, %arg2: memref<800x512xi32, #tpu.memory_space<vmem>>) attributes {dimension_semantics = [#tpu.dimension_semantics<parallel>], iteration_bounds = array<i64: 1>, scalar_prefetch = 0 : i64, scratch_operands = 0 : i64, tpu.core_type = #tpu.core_type<tc>, window_params = [{pipeline_mode = #tpu.pipeline_mode<synchronous>, transform_indices = @transform_0, window_bounds = array<i64: 800, 512>}, {transform_indices = @transform_1, window_bounds = array<i64: 800, 512>}]} {
    %c409600_i32 = arith.constant 409600 : i32
    %0 = arith.muli %arg0, %c409600_i32 : i32
    %c0 = arith.constant 0 : index
    %c0_0 = arith.constant 0 : index
    %1 = vector.load %arg1[%c0, %c0_0] : memref<800x512xi32, #tpu.memory_space<vmem>>, vector<800x512xi32>
    %2 = vector.broadcast %0 : i32 to vector<800x512xi32>
    %3 = arith.addi %1, %2 : vector<800x512xi32>
    %c0_1 = arith.constant 0 : index
    %c0_2 = arith.constant 0 : index
    %4 = vector.load %arg2[%c0_1, %c0_2] : memref<800x512xi32, #tpu.memory_space<vmem>>, vector<800x512xi32>
    tpu.vector_store %arg2[%c0_1, %c0_2], %3 {strides = array<i32>} : memref<800x512xi32, #tpu.memory_space<vmem>>, vector<800x512xi32>,
    return
  }
  func.func @transform_0(%arg0: i32) -> (i32, i32) {
    %c0_i32 = arith.constant 0 : i32
    %c0_i32_0 = arith.constant 0 : i32
    %c0_i32_1 = arith.constant 0 : i32
    return %c0_i32, %c0_i32_0 : i32, i32
  }
  func.func @transform_1(%arg0: i32) -> (i32, i32) {
    %c0_i32 = arith.constant 0 : i32
    %c0_i32_0 = arith.constant 0 : i32
    return %arg0, %c0_i32 : i32, i32
  }
}

</mosaic_0001>

<llo_original>
// kernel: tpu_custom_call.1
$region0: #{tpu_custom_call.1}
  #allocation0 [shape = 'u32[]', space=smem, size = 0x4, offset = 0x4, fixed_abs, tag = 'smem constant byte address 0x4 - core index']
  #allocation1 [shape = 'u32[144,128]{1,0:T(1,128)}', space=vmem, size = 0x12000, scoped, tag = 'internal scratch']
  %s0 = inlined_call_operand.hbm [shape: s32[800,512], index: 0, kind: input, shape index: {}]
  %s1 = inlined_call_operand.hbm [shape: s32[800,512], index: 1, kind: output, shape index: {}]
  %s2 = sld [smem:[#allocation0]]
  $region18: #{tpu_custom_call.1} parent=0
    _
  %s4 = ssub.s32 1, %s2
  %s5 = scalar_select 0, %s4, %s2
  $region1: #{tpu_custom_call.1} parent=0
    #allocation2 [shape = 'u8[1638400]{0}', space=vmem, size = 0x190000, scoped, tag = 'input window, operand 0, single buffered']
    #allocation3 [shape = 's32[1]{0}', space=sflag, size = 0x4, scoped, tag = 'scoped memory for tpu_custom_call.1']
    #allocation4 [shape = 's32[1]{0}', space=sflag, size = 0x4, scoped, tag = 'scoped memory for tpu_custom_call.1']
    #allocation5 [shape = 'u8[1638400]{0}', space=vmem, size = 0x190000, scoped, tag = 'output window, operand 0, single buffered']
    %6 = vsyncpa [#allocation3], 0
    %7 = vsyncpa [#allocation4], 0
    // Predicated region
    $region2: #{tpu_custom_call.1} parent=1 // pred_check
      _
    $region3: #{tpu_custom_call.1} parent=1 // pred_check_branch
      %9 = sbr.rel (0) target = $region5
    $region4: #{tpu_custom_call.1} parent=1 // pred_region
      %s11 = ssub.s32 51200, 51200
      %12 = vsyncadd [#allocation3], %s11
      %s13 = sshll.u32 [#allocation2], 4
      %s14 = int_to_ptr.vmem [resolvable:$true] %s13
      %19 = dma.hbm_to_vmem [thread:$0]  %s0, 51200, %s14, [#allocation3], 512, 512, 32
    $region5: #{tpu_custom_call.1} parent=1 // pred_fallthru
      _
    // Predicated region
    $region6: #{tpu_custom_call.1} parent=1 // pred_check
      _
    $region7: #{tpu_custom_call.1} parent=1 // pred_check_branch
      %21 = sbr.rel (0) target = $region9
    $region8: #{tpu_custom_call.1} parent=1 // pred_region
      %22 = dma.done [#allocation3], 51200
    $region9: #{tpu_custom_call.1} parent=1 // pred_fallthru
      _
    %s23 = smul.u32 0, 409600
    %v24 = vld [vmem:[#allocation2] sm:$0xff]
    %v25 = vld [vmem:[#allocation2 + $0x8] sm:$0xff]
    %v26 = vld [vmem:[#allocation2 + $0x10] sm:$0xff]
    %v27 = vld [vmem:[#allocation2 + $0x18] sm:$0xff]
    %v28 = vld [vmem:[#allocation2 + $0x20] sm:$0xff]
    %v29 = vld [vmem:[#allocation2 + $0x28] sm:$0xff]
    %v30 = vld [vmem:[#allocation2 + $0x30] sm:$0xff]
    %v31 = vld [vmem:[#allocation2 + $0x38] sm:$0xff]
    %v32 = vld [vmem:[#allocation2 + $0x40] sm:$0xff]
    %v33 = vld [vmem:[#allocation2 + $0x48] sm:$0xff]
    %v34 = vld [vmem:[#allocation2 + $0x50] sm:$0xff]
    %v35 = vld [vmem:[#allocation2 + $0x58] sm:$0xff]
    %v36 = vld [vmem:[#allocation2 + $0x60] sm:$0xff]
    %v37 = vld [vmem:[#allocation2 + $0x68] sm:$0xff]
    %v38 = vld [vmem:[#allocation2 + $0x70] sm:$0xff]
    %v39 = vld [vmem:[#allocation2 + $0x78] sm:$0xff]
    %v40 = vld [vmem:[#allocation2 + $0x80] sm:$0xff]
    %v41 = vld [vmem:[#allocation2 + $0x88] sm:$0xff]
    %v42 = vld [vmem:[#allocation2 + $0x90] sm:$0xff]
    %v43 = vld [vmem:[#allocation2 + $0x98] sm:$0xff]
    %v44 = vld [vmem:[#allocation2 + $0xa0] sm:$0xff]
    %v45 = vld [vmem:[#allocation2 + $0xa8] sm:$0xff]
    %v46 = vld [vmem:[#allocation2 + $0xb0] sm:$0xff]
    %v47 = vld [vmem:[#allocation2 + $0xb8] sm:$0xff]
    %v48 = vld [vmem:[#allocation2 + $0xc0] sm:$0xff]
    %v49 = vld [vmem:[#allocation2 + $0xc8] sm:$0xff]
    %v50 = vld [vmem:[#allocation2 + $0xd0] sm:$0xff]
    %v51 = vld [vmem:[#allocation2 + $0xd8] sm:$0xff]
    %v52 = vld [vmem:[#allocation2 + $0xe0] sm:$0xff]
    %v53 = vld [vmem:[#allocation2 + $0xe8] sm:$0xff]
    %v54 = vld [vmem:[#allocation2 + $0xf0] sm:$0xff]
    %v55 = vld [vmem:[#allocation2 + $0xf8] sm:$0xff]
    %v56 = vld [vmem:[#allocation2 + $0x100] sm:$0xff]
    %v57 = vld [vmem:[#allocation2 + $0x108] sm:$0xff]
    %v58 = vld [vmem:[#allocation2 + $0x110] sm:$0xff]
    %v59 = vld [vmem:[#allocation2 + $0x118] sm:$0xff]
    %v60 = vld [vmem:[#allocation2 + $0x120] sm:$0xff]
    %v61 = vld [vmem:[#allocation2 + $0x128] sm:$0xff]
    %v62 = vld [vmem:[#allocation2 + $0x130] sm:$0xff]
    %v63 = vld [vmem:[#allocation2 + $0x138] sm:$0xff]
    %v64 = vld [vmem:[#allocation2 + $0x140] sm:$0xff]
    %v65 = vld [vmem:[#allocation2 + $0x148] sm:$0xff]
    %v66 = vld [vmem:[#allocation2 + $0x150] sm:$0xff]
    %v67 = vld [vmem:[#allocation2 + $0x158] sm:$0xff]
    %v68 = vld [vmem:[#allocation2 + $0x160] sm:$0xff]
    %v69 = vld [vmem:[#allocation2 + $0x168] sm:$0xff]
    %v70 = vld [vmem:[#allocation2 + $0x170] sm:$0xff]
    %v71 = vld [vmem:[#allocation2 + $0x178] sm:$0xff]
    %v72 = vld [vmem:[#allocation2 + $0x180] sm:$0xff]
    %v73 = vld [vmem:[#allocation2 + $0x188] sm:$0xff]
    %v74 = vld [vmem:[#allocation2 + $0x190] sm:$0xff]
    %v75 = vld [vmem:[#allocation2 + $0x198] sm:$0xff]
    %v76 = vld [vmem:[#allocation2 + $0x1a0] sm:$0xff]
    %v77 = vld [vmem:[#allocation2 + $0x1a8] sm:$0xff]
    %v78 = vld [vmem:[#allocation2 + $0x1b0] sm:$0xff]
    %v79 = vld [vmem:[#allocation2 + $0x1b8] sm:$0xff]
    %v80 = vld [vmem:[#allocation2 + $0x1c0] sm:$0xff]
    %v81 = vld [vmem:[#allocation2 + $0x1c8] sm:$0xff]
    %v82 = vld [vmem:[#allocation2 + $0x1d0] sm:$0xff]
    %v83 = vld [vmem:[#allocation2 + $0x1d8] sm:$0xff]
    %v84 = vld [vmem:[#allocation2 + $0x1e0] sm:$0xff]
    %v85 = vld [vmem:[#allocation2 + $0x1e8] sm:$0xff]
    %v86 = vld [vmem:[#allocation2 + $0x1f0] sm:$0xff]
    %v87 = vld [vmem:[#allocation2 + $0x1f8] sm:$0xff]
    %v88 = vld [vmem:[#allocation2 + $0x200] sm:$0xff]
    %v89 = vld [vmem:[#allocation2 + $0x208] sm:$0xff]
    %v90 = vld [vmem:[#allocation2 + $0x210] sm:$0xff]
    %v91 = vld [vmem:[#allocation2 + $0x218] sm:$0xff]
    %v92 = vld [vmem:[#allocation2 + $0x220] sm:$0xff]
    %v93 = vld [vmem:[#allocation2 + $0x228] sm:$0xff]
    %v94 = vld [vmem:[#allocation2 + $0x230] sm:$0xff]
    %v95 = vld [vmem:[#allocation2 + $0x238] sm:$0xff]
    %v96 = vld [vmem:[#allocation2 + $0x240] sm:$0xff]
    %v97 = vld [vmem:[#allocation2 + $0x248] sm:$0xff]
    %v98 = vld [vmem:[#allocation2 + $0x250] sm:$0xff]
    %v99 = vld [vmem:[#allocation2 + $0x258] sm:$0xff]
    %v100 = vld [vmem:[#allocation2 + $0x260] sm:$0xff]
    %v101 = vld [vmem:[#allocation2 + $0x268] sm:$0xff]
    %v102 = vld [vmem:[#allocation2 + $0x270] sm:$0xff]
    %v103 = vld [vmem:[#allocation2 + $0x278] sm:$0xff]
    %v104 = vld [vmem:[#allocation2 + $0x280] sm:$0xff]
    %v105 = vld [vmem:[#allocation2 + $0x288] sm:$0xff]
    %v106 = vld [vmem:[#allocation2 + $0x290] sm:$0xff]
    %v107 = vld [vmem:[#allocation2 + $0x298] sm:$0xff]
    %v108 = vld [vmem:[#allocation2 + $0x2a0] sm:$0xff]
    %v109 = vld [vmem:[#allocation2 + $0x2a8] sm:$0xff]
    %v110 = vld [vmem:[#allocation2 + $0x2b0] sm:$0xff]
    %v111 = vld [vmem:[#allocation2 + $0x2b8] sm:$0xff]
    %v112 = vld [vmem:[#allocation2 + $0x2c0] sm:$0xff]
    %v113 = vld [vmem:[#allocation2 + $0x2c8] sm:$0xff]
    %v114 = vld [vmem:[#allocation2 + $0x2d0] sm:$0xff]
    %v115 = vld [vmem:[#allocation2 + $0x2d8] sm:$0xff]
    %v116 = vld [vmem:[#allocation2 + $0x2e0] sm:$0xff]
    %v117 = vld [vmem:[#allocation2 + $0x2e8] sm:$0xff]
    %v118 = vld [vmem:[#allocation2 + $0x2f0] sm:$0xff]
    %v119 = vld [vmem:[#allocation2 + $0x2f8] sm:$0xff]
    %v120 = vld [vmem:[#allocation2 + $0x300] sm:$0xff]
    %v121 = vld [vmem:[#allocation2 + $0x308] sm:$0xff]
    %v122 = vld [vmem:[#allocation2 + $0x310] sm:$0xff]
    %v123 = vld [vmem:[#allocation2 + $0x318] sm:$0xff]
    %v124 = vld [vmem:[#allocation2 + $0x320] sm:$0xff]
    %v125 = vld [vmem:[#allocation2 + $0x328] sm:$0xff]
    %v126 = vld [vmem:[#allocation2 + $0x330] sm:$0xff]
    %v127 = vld [vmem:[#allocation2 + $0x338] sm:$0xff]
    %v128 = vld [vmem:[#allocation2 + $0x340] sm:$0xff]
    %v129 = vld [vmem:[#allocation2 + $0x348] sm:$0xff]
    %v130 = vld [vmem:[#allocation2 + $0x350] sm:$0xff]
    %v131 = vld [vmem:[#allocation2 + $0x358] sm:$0xff]
    %v132 = vld [vmem:[#allocation2 + $0x360] sm:$0xff]
    %v133 = vld [vmem:[#allocation2 + $0x368] sm:$0xff]
    %v134 = vld [vmem:[#allocation2 + $0x370] sm:$0xff]
    %v135 = vld [vmem:[#allocation2 + $0x378] sm:$0xff]
    %v136 = vld [vmem:[#allocation2 + $0x380] sm:$0xff]
    %v137 = vld [vmem:[#allocation2 + $0x388] sm:$0xff]
    %v138 = vld [vmem:[#allocation2 + $0x390] sm:$0xff]
    %v139 = vld [vmem:[#allocation2 + $0x398] sm:$0xff]
    %v140 = vld [vmem:[#allocation2 + $0x3a0] sm:$0xff]
    %v141 = vld [vmem:[#allocation2 + $0x3a8] sm:$0xff]
    %v142 = vld [vmem:[#allocation2 + $0x3b0] sm:$0xff]
    %v143 = vld [vmem:[#allocation2 + $0x3b8] sm:$0xff]
    %v144 = vld [vmem:[#allocation2 + $0x3c0] sm:$0xff]
    %v145 = vld [vmem:[#allocation2 + $0x3c8] sm:$0xff]
    %v146 = vld [vmem:[#allocation2 + $0x3d0] sm:$0xff]
    %v147 = vld [vmem:[#allocation2 + $0x3d8] sm:$0xff]
    %v148 = vld [vmem:[#allocation2 + $0x3e0] sm:$0xff]
    %v149 = vld [vmem:[#allocation2 + $0x3e8] sm:$0xff]
    %v150 = vld [vmem:[#allocation2 + $0x3f0] sm:$0xff]
    %v151 = vld [vmem:[#allocation2 + $0x3f8] sm:$0xff]
    %v152 = vld [vmem:[#allocation2 + $0x400] sm:$0xff]
    %v153 = vld [vmem:[#allocation2 + $0x408] sm:$0xff]
    %v154 = vld [vmem:[#allocation2 + $0x410] sm:$0xff]
    %v155 = vld [vmem:[#allocation2 + $0x418] sm:$0xff]
    %v156 = vld [vmem:[#allocation2 + $0x420] sm:$0xff]
    %v157 = vld [vmem:[#allocation2 + $0x428] sm:$0xff]
    %v158 = vld [vmem:[#allocation2 + $0x430] sm:$0xff]
    %v159 = vld [vmem:[#allocation2 + $0x438] sm:$0xff]
    %v160 = vld [vmem:[#allocation2 + $0x440] sm:$0xff]
    %v161 = vld [vmem:[#allocation2 + $0x448] sm:$0xff]
    %v162 = vld [vmem:[#allocation2 + $0x450] sm:$0xff]
    %v163 = vld [vmem:[#allocation2 + $0x458] sm:$0xff]
    %v164 = vld [vmem:[#allocation2 + $0x460] sm:$0xff]
    %v165 = vld [vmem:[#allocation2 + $0x468] sm:$0xff]
    %v166 = vld [vmem:[#allocation2 + $0x470] sm:$0xff]
    %v167 = vld [vmem:[#allocation2 + $0x478] sm:$0xff]
    %v168 = vld [vmem:[#allocation2 + $0x480] sm:$0xff]
    %v169 = vld [vmem:[#allocation2 + $0x488] sm:$0xff]
    %v170 = vld [vmem:[#allocation2 + $0x490] sm:$0xff]
    %v171 = vld [vmem:[#allocation2 + $0x498] sm:$0xff]
    %v172 = vld [vmem:[#allocation2 + $0x4a0] sm:$0xff]
    %v173 = vld [vmem:[#allocation2 + $0x4a8] sm:$0xff]
    %v174 = vld [vmem:[#allocation2 + $0x4b0] sm:$0xff]
    %v175 = vld [vmem:[#allocation2 + $0x4b8] sm:$0xff]
    %v176 = vld [vmem:[#allocation2 + $0x4c0] sm:$0xff]
    %v177 = vld [vmem:[#allocation2 + $0x4c8] sm:$0xff]
    %v178 = vld [vmem:[#allocation2 + $0x4d0] sm:$0xff]
    %v179 = vld [vmem:[#allocation2 + $0x4d8] sm:$0xff]
    %v180 = vld [vmem:[#allocation2 + $0x4e0] sm:$0xff]
    %v181 = vld [vmem:[#allocation2 + $0x4e8] sm:$0xff]
    %v182 = vld [vmem:[#allocation2 + $0x4f0] sm:$0xff]
    %v183 = vld [vmem:[#allocation2 + $0x4f8] sm:$0xff]
    %v184 = vld [vmem:[#allocation2 + $0x500] sm:$0xff]
    %v185 = vld [vmem:[#allocation2 + $0x508] sm:$0xff]
    %v186 = vld [vmem:[#allocation2 + $0x510] sm:$0xff]
    %v187 = vld [vmem:[#allocation2 + $0x518] sm:$0xff]
    %v188 = vld [vmem:[#allocation2 + $0x520] sm:$0xff]
    %v189 = vld [vmem:[#allocation2 + $0x528] sm:$0xff]
    %v190 = vld [vmem:[#allocation2 + $0x530] sm:$0xff]
    %v191 = vld [vmem:[#allocation2 + $0x538] sm:$0xff]
    %v192 = vld [vmem:[#allocation2 + $0x540] sm:$0xff]
    %v193 = vld [vmem:[#allocation2 + $0x548] sm:$0xff]
    %v194 = vld [vmem:[#allocation2 + $0x550] sm:$0xff]
    %v195 = vld [vmem:[#allocation2 + $0x558] sm:$0xff]
    %v196 = vld [vmem:[#allocation2 + $0x560] sm:$0xff]
    %v197 = vld [vmem:[#allocation2 + $0x568] sm:$0xff]
    %v198 = vld [vmem:[#allocation2 + $0x570] sm:$0xff]
    %v199 = vld [vmem:[#allocation2 + $0x578] sm:$0xff]
    %v200 = vld [vmem:[#allocation2 + $0x580] sm:$0xff]
    %v201 = vld [vmem:[#allocation2 + $0x588] sm:$0xff]
    %v202 = vld [vmem:[#allocation2 + $0x590] sm:$0xff]
    %v203 = vld [vmem:[#allocation2 + $0x598] sm:$0xff]
    %v204 = vld [vmem:[#allocation2 + $0x5a0] sm:$0xff]
    %v205 = vld [vmem:[#allocation2 + $0x5a8] sm:$0xff]
    %v206 = vld [vmem:[#allocation2 + $0x5b0] sm:$0xff]
    %v207 = vld [vmem:[#allocation2 + $0x5b8] sm:$0xff]
    %v208 = vld [vmem:[#allocation2 + $0x5c0] sm:$0xff]
    %v209 = vld [vmem:[#allocation2 + $0x5c8] sm:$0xff]
    %v210 = vld [vmem:[#allocation2 + $0x5d0] sm:$0xff]
    %v211 = vld [vmem:[#allocation2 + $0x5d8] sm:$0xff]
    %v212 = vld [vmem:[#allocation2 + $0x5e0] sm:$0xff]
    %v213 = vld [vmem:[#allocation2 + $0x5e8] sm:$0xff]
    %v214 = vld [vmem:[#allocation2 + $0x5f0] sm:$0xff]
    %v215 = vld [vmem:[#allocation2 + $0x5f8] sm:$0xff]
    %v216 = vld [vmem:[#allocation2 + $0x600] sm:$0xff]
    %v217 = vld [vmem:[#allocation2 + $0x608] sm:$0xff]
    %v218 = vld [vmem:[#allocation2 + $0x610] sm:$0xff]
    %v219 = vld [vmem:[#allocation2 + $0x618] sm:$0xff]
    %v220 = vld [vmem:[#allocation2 + $0x620] sm:$0xff]
    %v221 = vld [vmem:[#allocation2 + $0x628] sm:$0xff]
    %v222 = vld [vmem:[#allocation2 + $0x630] sm:$0xff]
    %v223 = vld [vmem:[#allocation2 + $0x638] sm:$0xff]
    %v224 = vld [vmem:[#allocation2 + $0x640] sm:$0xff]
    %v225 = vld [vmem:[#allocation2 + $0x648] sm:$0xff]
    %v226 = vld [vmem:[#allocation2 + $0x650] sm:$0xff]
    %v227 = vld [vmem:[#allocation2 + $0x658] sm:$0xff]
    %v228 = vld [vmem:[#allocation2 + $0x660] sm:$0xff]
    %v229 = vld [vmem:[#allocation2 + $0x668] sm:$0xff]
    %v230 = vld [vmem:[#allocation2 + $0x670] sm:$0xff]
    %v231 = vld [vmem:[#allocation2 + $0x678] sm:$0xff]
    %v232 = vld [vmem:[#allocation2 + $0x680] sm:$0xff]
    %v233 = vld [vmem:[#allocation2 + $0x688] sm:$0xff]
    %v234 = vld [vmem:[#allocation2 + $0x690] sm:$0xff]
    %v235 = vld [vmem:[#allocation2 + $0x698] sm:$0xff]
    %v236 = vld [vmem:[#allocation2 + $0x6a0] sm:$0xff]
    %v237 = vld [vmem:[#allocation2 + $0x6a8] sm:$0xff]
    %v238 = vld [vmem:[#allocation2 + $0x6b0] sm:$0xff]
    %v239 = vld [vmem:[#allocation2 + $0x6b8] sm:$0xff]
    %v240 = vld [vmem:[#allocation2 + $0x6c0] sm:$0xff]
    %v241 = vld [vmem:[#allocation2 + $0x6c8] sm:$0xff]
    %v242 = vld [vmem:[#allocation2 + $0x6d0] sm:$0xff]
    %v243 = vld [vmem:[#allocation2 + $0x6d8] sm:$0xff]
    %v244 = vld [vmem:[#allocation2 + $0x6e0] sm:$0xff]
    %v245 = vld [vmem:[#allocation2 + $0x6e8] sm:$0xff]
    %v246 = vld [vmem:[#allocation2 + $0x6f0] sm:$0xff]
    %v247 = vld [vmem:[#allocation2 + $0x6f8] sm:$0xff]
    %v248 = vld [vmem:[#allocation2 + $0x700] sm:$0xff]
    %v249 = vld [vmem:[#allocation2 + $0x708] sm:$0xff]
    %v250 = vld [vmem:[#allocation2 + $0x710] sm:$0xff]
    %v251 = vld [vmem:[#allocation2 + $0x718] sm:$0xff]
    %v252 = vld [vmem:[#allocation2 + $0x720] sm:$0xff]
    %v253 = vld [vmem:[#allocation2 + $0x728] sm:$0xff]
    %v254 = vld [vmem:[#allocation2 + $0x730] sm:$0xff]
    %v255 = vld [vmem:[#allocation2 + $0x738] sm:$0xff]
    %v256 = vld [vmem:[#allocation2 + $0x740] sm:$0xff]
    %v257 = vld [vmem:[#allocation2 + $0x748] sm:$0xff]
    %v258 = vld [vmem:[#allocation2 + $0x750] sm:$0xff]
    %v259 = vld [vmem:[#allocation2 + $0x758] sm:$0xff]
    %v260 = vld [vmem:[#allocation2 + $0x760] sm:$0xff]
    %v261 = vld [vmem:[#allocation2 + $0x768] sm:$0xff]
    %v262 = vld [vmem:[#allocation2 + $0x770] sm:$0xff]
    %v263 = vld [vmem:[#allocation2 + $0x778] sm:$0xff]
    %v264 = vld [vmem:[#allocation2 + $0x780] sm:$0xff]
    %v265 = vld [vmem:[#allocation2 + $0x788] sm:$0xff]
    %v266 = vld [vmem:[#allocation2 + $0x790] sm:$0xff]
    %v267 = vld [vmem:[#allocation2 + $0x798] sm:$0xff]
    %v268 = vld [vmem:[#allocation2 + $0x7a0] sm:$0xff]
    %v269 = vld [vmem:[#allocation2 + $0x7a8] sm:$0xff]
    %v270 = vld [vmem:[#allocation2 + $0x7b0] sm:$0xff]
    %v271 = vld [vmem:[#allocation2 + $0x7b8] sm:$0xff]
    %v272 = vld [vmem:[#allocation2 + $0x7c0] sm:$0xff]
    %v273 = vld [vmem:[#allocation2 + $0x7c8] sm:$0xff]
    %v274 = vld [vmem:[#allocation2 + $0x7d0] sm:$0xff]
    %v275 = vld [vmem:[#allocation2 + $0x7d8] sm:$0xff]
    %v276 = vld [vmem:[#allocation2 + $0x7e0] sm:$0xff]
    %v277 = vld [vmem:[#allocation2 + $0x7e8] sm:$0xff]
    %v278 = vld [vmem:[#allocation2 + $0x7f0] sm:$0xff]
    %v279 = vld [vmem:[#allocation2 + $0x7f8] sm:$0xff]
    %v280 = vld [vmem:[#allocation2 + $0x800] sm:$0xff]
    %v281 = vld [vmem:[#allocation2 + $0x808] sm:$0xff]
    %v282 = vld [vmem:[#allocation2 + $0x810] sm:$0xff]
    %v283 = vld [vmem:[#allocation2 + $0x818] sm:$0xff]
    %v284 = vld [vmem:[#allocation2 + $0x820] sm:$0xff]
    %v285 = vld [vmem:[#allocation2 + $0x828] sm:$0xff]
    %v286 = vld [vmem:[#allocation2 + $0x830] sm:$0xff]
    %v287 = vld [vmem:[#allocation2 + $0x838] sm:$0xff]
    %v288 = vld [vmem:[#allocation2 + $0x840] sm:$0xff]
    %v289 = vld [vmem:[#allocation2 + $0x848] sm:$0xff]
    %v290 = vld [vmem:[#allocation2 + $0x850] sm:$0xff]
    %v291 = vld [vmem:[#allocation2 + $0x858] sm:$0xff]
    %v292 = vld [vmem:[#allocation2 + $0x860] sm:$0xff]
    %v293 = vld [vmem:[#allocation2 + $0x868] sm:$0xff]
    %v294 = vld [vmem:[#allocation2 + $0x870] sm:$0xff]
    %v295 = vld [vmem:[#allocation2 + $0x878] sm:$0xff]
    %v296 = vld [vmem:[#allocation2 + $0x880] sm:$0xff]
    %v297 = vld [vmem:[#allocation2 + $0x888] sm:$0xff]
    %v298 = vld [vmem:[#allocation2 + $0x890] sm:$0xff]
    %v299 = vld [vmem:[#allocation2 + $0x898] sm:$0xff]
    %v300 = vld [vmem:[#allocation2 + $0x8a0] sm:$0xff]
    %v301 = vld [vmem:[#allocation2 + $0x8a8] sm:$0xff]
    %v302 = vld [vmem:[#allocation2 + $0x8b0] sm:$0xff]
    %v303 = vld [vmem:[#allocation2 + $0x8b8] sm:$0xff]
    %v304 = vld [vmem:[#allocation2 + $0x8c0] sm:$0xff]
    %v305 = vld [vmem:[#allocation2 + $0x8c8] sm:$0xff]
    %v306 = vld [vmem:[#allocation2 + $0x8d0] sm:$0xff]
    %v307 = vld [vmem:[#allocation2 + $0x8d8] sm:$0xff]
    %v308 = vld [vmem:[#allocation2 + $0x8e0] sm:$0xff]
    %v309 = vld [vmem:[#allocation2 + $0x8e8] sm:$0xff]
    %v310 = vld [vmem:[#allocation2 + $0x8f0] sm:$0xff]
    %v311 = vld [vmem:[#allocation2 + $0x8f8] sm:$0xff]
    %v312 = vld [vmem:[#allocation2 + $0x900] sm:$0xff]
    %v313 = vld [vmem:[#allocation2 + $0x908] sm:$0xff]
    %v314 = vld [vmem:[#allocation2 + $0x910] sm:$0xff]
    %v315 = vld [vmem:[#allocation2 + $0x918] sm:$0xff]
    %v316 = vld [vmem:[#allocation2 + $0x920] sm:$0xff]
    %v317 = vld [vmem:[#allocation2 + $0x928] sm:$0xff]
    %v318 = vld [vmem:[#allocation2 + $0x930] sm:$0xff]
    %v319 = vld [vmem:[#allocation2 + $0x938] sm:$0xff]
    %v320 = vld [vmem:[#allocation2 + $0x940] sm:$0xff]
    %v321 = vld [vmem:[#allocation2 + $0x948] sm:$0xff]
    %v322 = vld [vmem:[#allocation2 + $0x950] sm:$0xff]
    %v323 = vld [vmem:[#allocation2 + $0x958] sm:$0xff]
    %v324 = vld [vmem:[#allocation2 + $0x960] sm:$0xff]
    %v325 = vld [vmem:[#allocation2 + $0x968] sm:$0xff]
    %v326 = vld [vmem:[#allocation2 + $0x970] sm:$0xff]
    %v327 = vld [vmem:[#allocation2 + $0x978] sm:$0xff]
    %v328 = vld [vmem:[#allocation2 + $0x980] sm:$0xff]
    %v329 = vld [vmem:[#allocation2 + $0x988] sm:$0xff]
    %v330 = vld [vmem:[#allocation2 + $0x990] sm:$0xff]
    %v331 = vld [vmem:[#allocation2 + $0x998] sm:$0xff]
    %v332 = vld [vmem:[#allocation2 + $0x9a0] sm:$0xff]
    %v333 = vld [vmem:[#allocation2 + $0x9a8] sm:$0xff]
    %v334 = vld [vmem:[#allocation2 + $0x9b0] sm:$0xff]
    %v335 = vld [vmem:[#allocation2 + $0x9b8] sm:$0xff]
    %v336 = vld [vmem:[#allocation2 + $0x9c0] sm:$0xff]
    %v337 = vld [vmem:[#allocation2 + $0x9c8] sm:$0xff]
    %v338 = vld [vmem:[#allocation2 + $0x9d0] sm:$0xff]
    %v339 = vld [vmem:[#allocation2 + $0x9d8] sm:$0xff]
    %v340 = vld [vmem:[#allocation2 + $0x9e0] sm:$0xff]
    %v341 = vld [vmem:[#allocation2 + $0x9e8] sm:$0xff]
    %v342 = vld [vmem:[#allocation2 + $0x9f0] sm:$0xff]
    %v343 = vld [vmem:[#allocation2 + $0x9f8] sm:$0xff]
    %v344 = vld [vmem:[#allocation2 + $0xa00] sm:$0xff]
    %v345 = vld [vmem:[#allocation2 + $0xa08] sm:$0xff]
    %v346 = vld [vmem:[#allocation2 + $0xa10] sm:$0xff]
    %v347 = vld [vmem:[#allocation2 + $0xa18] sm:$0xff]
    %v348 = vld [vmem:[#allocation2 + $0xa20] sm:$0xff]
    %v349 = vld [vmem:[#allocation2 + $0xa28] sm:$0xff]
    %v350 = vld [vmem:[#allocation2 + $0xa30] sm:$0xff]
    %v351 = vld [vmem:[#allocation2 + $0xa38] sm:$0xff]
    %v352 = vld [vmem:[#allocation2 + $0xa40] sm:$0xff]
    %v353 = vld [vmem:[#allocation2 + $0xa48] sm:$0xff]
    %v354 = vld [vmem:[#allocation2 + $0xa50] sm:$0xff]
    %v355 = vld [vmem:[#allocation2 + $0xa58] sm:$0xff]
    %v356 = vld [vmem:[#allocation2 + $0xa60] sm:$0xff]
    %v357 = vld [vmem:[#allocation2 + $0xa68] sm:$0xff]
    %v358 = vld [vmem:[#allocation2 + $0xa70] sm:$0xff]
    %v359 = vld [vmem:[#allocation2 + $0xa78] sm:$0xff]
    %v360 = vld [vmem:[#allocation2 + $0xa80] sm:$0xff]
    %v361 = vld [vmem:[#allocation2 + $0xa88] sm:$0xff]
    %v362 = vld [vmem:[#allocation2 + $0xa90] sm:$0xff]
    %v363 = vld [vmem:[#allocation2 + $0xa98] sm:$0xff]
    %v364 = vld [vmem:[#allocation2 + $0xaa0] sm:$0xff]
    %v365 = vld [vmem:[#allocation2 + $0xaa8] sm:$0xff]
    %v366 = vld [vmem:[#allocation2 + $0xab0] sm:$0xff]
    %v367 = vld [vmem:[#allocation2 + $0xab8] sm:$0xff]
    %v368 = vld [vmem:[#allocation2 + $0xac0] sm:$0xff]
    %v369 = vld [vmem:[#allocation2 + $0xac8] sm:$0xff]
    %v370 = vld [vmem:[#allocation2 + $0xad0] sm:$0xff]
    %v371 = vld [vmem:[#allocation2 + $0xad8] sm:$0xff]
    %v372 = vld [vmem:[#allocation2 + $0xae0] sm:$0xff]
    %v373 = vld [vmem:[#allocation2 + $0xae8] sm:$0xff]
    %v374 = vld [vmem:[#allocation2 + $0xaf0] sm:$0xff]
    %v375 = vld [vmem:[#allocation2 + $0xaf8] sm:$0xff]
    %v376 = vld [vmem:[#allocation2 + $0xb00] sm:$0xff]
    %v377 = vld [vmem:[#allocation2 + $0xb08] sm:$0xff]
    %v378 = vld [vmem:[#allocation2 + $0xb10] sm:$0xff]
    %v379 = vld [vmem:[#allocation2 + $0xb18] sm:$0xff]
    %v380 = vld [vmem:[#allocation2 + $0xb20] sm:$0xff]
    %v381 = vld [vmem:[#allocation2 + $0xb28] sm:$0xff]
    %v382 = vld [vmem:[#allocation2 + $0xb30] sm:$0xff]
    %v383 = vld [vmem:[#allocation2 + $0xb38] sm:$0xff]
    %v384 = vld [vmem:[#allocation2 + $0xb40] sm:$0xff]
    %v385 = vld [vmem:[#allocation2 + $0xb48] sm:$0xff]
    %v386 = vld [vmem:[#allocation2 + $0xb50] sm:$0xff]
    %v387 = vld [vmem:[#allocation2 + $0xb58] sm:$0xff]
    %v388 = vld [vmem:[#allocation2 + $0xb60] sm:$0xff]
    %v389 = vld [vmem:[#allocation2 + $0xb68] sm:$0xff]
    %v390 = vld [vmem:[#allocation2 + $0xb70] sm:$0xff]
    %v391 = vld [vmem:[#allocation2 + $0xb78] sm:$0xff]
    %v392 = vld [vmem:[#allocation2 + $0xb80] sm:$0xff]
    %v393 = vld [vmem:[#allocation2 + $0xb88] sm:$0xff]
    %v394 = vld [vmem:[#allocation2 + $0xb90] sm:$0xff]
    %v395 = vld [vmem:[#allocation2 + $0xb98] sm:$0xff]
    %v396 = vld [vmem:[#allocation2 + $0xba0] sm:$0xff]
    %v397 = vld [vmem:[#allocation2 + $0xba8] sm:$0xff]
    %v398 = vld [vmem:[#allocation2 + $0xbb0] sm:$0xff]
    %v399 = vld [vmem:[#allocation2 + $0xbb8] sm:$0xff]
    %v400 = vld [vmem:[#allocation2 + $0xbc0] sm:$0xff]
    %v401 = vld [vmem:[#allocation2 + $0xbc8] sm:$0xff]
    %v402 = vld [vmem:[#allocation2 + $0xbd0] sm:$0xff]
    %v403 = vld [vmem:[#allocation2 + $0xbd8] sm:$0xff]
    %v404 = vld [vmem:[#allocation2 + $0xbe0] sm:$0xff]
    %v405 = vld [vmem:[#allocation2 + $0xbe8] sm:$0xff]
    %v406 = vld [vmem:[#allocation2 + $0xbf0] sm:$0xff]
    %v407 = vld [vmem:[#allocation2 + $0xbf8] sm:$0xff]
    %v408 = vld [vmem:[#allocation2 + $0xc00] sm:$0xff]
    %v409 = vld [vmem:[#allocation2 + $0xc08] sm:$0xff]
    %v410 = vld [vmem:[#allocation2 + $0xc10] sm:$0xff]
    %v411 = vld [vmem:[#allocation2 + $0xc18] sm:$0xff]
    %v412 = vld [vmem:[#allocation2 + $0xc20] sm:$0xff]
    %v413 = vld [vmem:[#allocation2 + $0xc28] sm:$0xff]
    %v414 = vld [vmem:[#allocation2 + $0xc30] sm:$0xff]
    %v415 = vld [vmem:[#allocation2 + $0xc38] sm:$0xff]
    %v416 = vld [vmem:[#allocation2 + $0xc40] sm:$0xff]
    %v417 = vld [vmem:[#allocation2 + $0xc48] sm:$0xff]
    %v418 = vld [vmem:[#allocation2 + $0xc50] sm:$0xff]
    %v419 = vld [vmem:[#allocation2 + $0xc58] sm:$0xff]
    %v420 = vld [vmem:[#allocation2 + $0xc60] sm:$0xff]
    %v421 = vld [vmem:[#allocation2 + $0xc68] sm:$0xff]
    %v422 = vld [vmem:[#allocation2 + $0xc70] sm:$0xff]
    %v423 = vld [vmem:[#allocation2 + $0xc78] sm:$0xff]
    %v424 = vstv %s23
    %v425 = vadd.s32 %v24, %v424
    %v426 = vadd.s32 %v25, %v424
    %v427 = vadd.s32 %v26, %v424
    %v428 = vadd.s32 %v27, %v424
    %v429 = vadd.s32 %v28, %v424
    %v430 = vadd.s32 %v29, %v424
    %v431 = vadd.s32 %v30, %v424
    %v432 = vadd.s32 %v31, %v424
    %v433 = vadd.s32 %v32, %v424
    %v434 = vadd.s32 %v33, %v424
    %v435 = vadd.s32 %v34, %v424
    %v436 = vadd.s32 %v35, %v424
    %v437 = vadd.s32 %v36, %v424
    %v438 = vadd.s32 %v37, %v424
    %v439 = vadd.s32 %v38, %v424
    %v440 = vadd.s32 %v39, %v424
    %v441 = vadd.s32 %v40, %v424
    %v442 = vadd.s32 %v41, %v424
    %v443 = vadd.s32 %v42, %v424
    %v444 = vadd.s32 %v43, %v424
    %v445 = vadd.s32 %v44, %v424
    %v446 = vadd.s32 %v45, %v424
    %v447 = vadd.s32 %v46, %v424
    %v448 = vadd.s32 %v47, %v424
    %v449 = vadd.s32 %v48, %v424
    %v450 = vadd.s32 %v49, %v424
    %v451 = vadd.s32 %v50, %v424
    %v452 = vadd.s32 %v51, %v424
    %v453 = vadd.s32 %v52, %v424
    %v454 = vadd.s32 %v53, %v424
    %v455 = vadd.s32 %v54, %v424
    %v456 = vadd.s32 %v55, %v424
    %v457 = vadd.s32 %v56, %v424
    %v458 = vadd.s32 %v57, %v424
    %v459 = vadd.s32 %v58, %v424
    %v460 = vadd.s32 %v59, %v424
    %v461 = vadd.s32 %v60, %v424
    %v462 = vadd.s32 %v61, %v424
    %v463 = vadd.s32 %v62, %v424
    %v464 = vadd.s32 %v63, %v424
    %v465 = vadd.s32 %v64, %v424
    %v466 = vadd.s32 %v65, %v424
    %v467 = vadd.s32 %v66, %v424
    %v468 = vadd.s32 %v67, %v424
    %v469 = vadd.s32 %v68, %v424
    %v470 = vadd.s32 %v69, %v424
    %v471 = vadd.s32 %v70, %v424
    %v472 = vadd.s32 %v71, %v424
    %v473 = vadd.s32 %v72, %v424
    %v474 = vadd.s32 %v73, %v424
    %v475 = vadd.s32 %v74, %v424
    %v476 = vadd.s32 %v75, %v424
    %v477 = vadd.s32 %v76, %v424
    %v478 = vadd.s32 %v77, %v424
    %v479 = vadd.s32 %v78, %v424
    %v480 = vadd.s32 %v79, %v424
    %v481 = vadd.s32 %v80, %v424
    %v482 = vadd.s32 %v81, %v424
    %v483 = vadd.s32 %v82, %v424
    %v484 = vadd.s32 %v83, %v424
    %v485 = vadd.s32 %v84, %v424
    %v486 = vadd.s32 %v85, %v424
    %v487 = vadd.s32 %v86, %v424
    %v488 = vadd.s32 %v87, %v424
    %v489 = vadd.s32 %v88, %v424
    %v490 = vadd.s32 %v89, %v424
    %v491 = vadd.s32 %v90, %v424
    %v492 = vadd.s32 %v91, %v424
    %v493 = vadd.s32 %v92, %v424
    %v494 = vadd.s32 %v93, %v424
    %v495 = vadd.s32 %v94, %v424
    %v496 = vadd.s32 %v95, %v424
    %v497 = vadd.s32 %v96, %v424
    %v498 = vadd.s32 %v97, %v424
    %v499 = vadd.s32 %v98, %v424
    %v500 = vadd.s32 %v99, %v424
    %v501 = vadd.s32 %v100, %v424
    %v502 = vadd.s32 %v101, %v424
    %v503 = vadd.s32 %v102, %v424
    %v504 = vadd.s32 %v103, %v424
    %v505 = vadd.s32 %v104, %v424
    %v506 = vadd.s32 %v105, %v424
    %v507 = vadd.s32 %v106, %v424
    %v508 = vadd.s32 %v107, %v424
    %v509 = vadd.s32 %v108, %v424
    %v510 = vadd.s32 %v109, %v424
    %v511 = vadd.s32 %v110, %v424
    %v512 = vadd.s32 %v111, %v424
    %v513 = vadd.s32 %v112, %v424
    %v514 = vadd.s32 %v113, %v424
    %v515 = vadd.s32 %v114, %v424
    %v516 = vadd.s32 %v115, %v424
    %v517 = vadd.s32 %v116, %v424
    %v518 = vadd.s32 %v117, %v424
    %v519 = vadd.s32 %v118, %v424
    %v520 = vadd.s32 %v119, %v424
    %v521 = vadd.s32 %v120, %v424
    %v522 = vadd.s32 %v121, %v424
    %v523 = vadd.s32 %v122, %v424
    %v524 = vadd.s32 %v123, %v424
    %v525 = vadd.s32 %v124, %v424
    %v526 = vadd.s32 %v125, %v424
    %v527 = vadd.s32 %v126, %v424
    %v528 = vadd.s32 %v127, %v424
    %v529 = vadd.s32 %v128, %v424
    %v530 = vadd.s32 %v129, %v424
    %v531 = vadd.s32 %v130, %v424
    %v532 = vadd.s32 %v131, %v424
    %v533 = vadd.s32 %v132, %v424
    %v534 = vadd.s32 %v133, %v424
    %v535 = vadd.s32 %v134, %v424
    %v536 = vadd.s32 %v135, %v424
    %v537 = vadd.s32 %v136, %v424
    %v538 = vadd.s32 %v137, %v424
    %v539 = vadd.s32 %v138, %v424
    %v540 = vadd.s32 %v139, %v424
    %v541 = vadd.s32 %v140, %v424
    %v542 = vadd.s32 %v141, %v424
    %v543 = vadd.s32 %v142, %v424
    %v544 = vadd.s32 %v143, %v424
    %v545 = vadd.s32 %v144, %v424
    %v546 = vadd.s32 %v145, %v424
    %v547 = vadd.s32 %v146, %v424
    %v548 = vadd.s32 %v147, %v424
    %v549 = vadd.s32 %v148, %v424
    %v550 = vadd.s32 %v149, %v424
    %v551 = vadd.s32 %v150, %v424
    %v552 = vadd.s32 %v151, %v424
    %v553 = vadd.s32 %v152, %v424
    %v554 = vadd.s32 %v153, %v424
    %v555 = vadd.s32 %v154, %v424
    %v556 = vadd.s32 %v155, %v424
    %v557 = vadd.s32 %v156, %v424
    %v558 = vadd.s32 %v157, %v424
    %v559 = vadd.s32 %v158, %v424
    %v560 = vadd.s32 %v159, %v424
    %v561 = vadd.s32 %v160, %v424
    %v562 = vadd.s32 %v161, %v424
    %v563 = vadd.s32 %v162, %v424
    %v564 = vadd.s32 %v163, %v424
    %v565 = vadd.s32 %v164, %v424
    %v566 = vadd.s32 %v165, %v424
    %v567 = vadd.s32 %v166, %v424
    %v568 = vadd.s32 %v167, %v424
    %v569 = vadd.s32 %v168, %v424
    %v570 = vadd.s32 %v169, %v424
    %v571 = vadd.s32 %v170, %v424
    %v572 = vadd.s32 %v171, %v424
    %v573 = vadd.s32 %v172, %v424
    %v574 = vadd.s32 %v173, %v424
    %v575 = vadd.s32 %v174, %v424
    %v576 = vadd.s32 %v175, %v424
    %v577 = vadd.s32 %v176, %v424
    %v578 = vadd.s32 %v177, %v424
    %v579 = vadd.s32 %v178, %v424
    %v580 = vadd.s32 %v179, %v424
    %v581 = vadd.s32 %v180, %v424
    %v582 = vadd.s32 %v181, %v424
    %v583 = vadd.s32 %v182, %v424
    %v584 = vadd.s32 %v183, %v424
    %v585 = vadd.s32 %v184, %v424
    %v586 = vadd.s32 %v185, %v424
    %v587 = vadd.s32 %v186, %v424
    %v588 = vadd.s32 %v187, %v424
    %v589 = vadd.s32 %v188, %v424
    %v590 = vadd.s32 %v189, %v424
    %v591 = vadd.s32 %v190, %v424
    %v592 = vadd.s32 %v191, %v424
    %v593 = vadd.s32 %v192, %v424
    %v594 = vadd.s32 %v193, %v424
    %v595 = vadd.s32 %v194, %v424
    %v596 = vadd.s32 %v195, %v424
    %v597 = vadd.s32 %v196, %v424
    %v598 = vadd.s32 %v197, %v424
    %v599 = vadd.s32 %v198, %v424
    %v600 = vadd.s32 %v199, %v424
    %v601 = vadd.s32 %v200, %v424
    %v602 = vadd.s32 %v201, %v424
    %v603 = vadd.s32 %v202, %v424
    %v604 = vadd.s32 %v203, %v424
    %v605 = vadd.s32 %v204, %v424
    %v606 = vadd.s32 %v205, %v424
    %v607 = vadd.s32 %v206, %v424
    %v608 = vadd.s32 %v207, %v424
    %v609 = vadd.s32 %v208, %v424
    %v610 = vadd.s32 %v209, %v424
    %v611 = vadd.s32 %v210, %v424
    %v612 = vadd.s32 %v211, %v424
    %v613 = vadd.s32 %v212, %v424
    %v614 = vadd.s32 %v213, %v424
    %v615 = vadd.s32 %v214, %v424
    %v616 = vadd.s32 %v215, %v424
    %v617 = vadd.s32 %v216, %v424
    %v618 = vadd.s32 %v217, %v424
    %v619 = vadd.s32 %v218, %v424
    %v620 = vadd.s32 %v219, %v424
    %v621 = vadd.s32 %v220, %v424
    %v622 = vadd.s32 %v221, %v424
    %v623 = vadd.s32 %v222, %v424
    %v624 = vadd.s32 %v223, %v424
    %v625 = vadd.s32 %v224, %v424
    %v626 = vadd.s32 %v225, %v424
    %v627 = vadd.s32 %v226, %v424
    %v628 = vadd.s32 %v227, %v424
    %v629 = vadd.s32 %v228, %v424
    %v630 = vadd.s32 %v229, %v424
    %v631 = vadd.s32 %v230, %v424
    %v632 = vadd.s32 %v231, %v424
    %v633 = vadd.s32 %v232, %v424
    %v634 = vadd.s32 %v233, %v424
    %v635 = vadd.s32 %v234, %v424
    %v636 = vadd.s32 %v235, %v424
    %v637 = vadd.s32 %v236, %v424
    %v638 = vadd.s32 %v237, %v424
    %v639 = vadd.s32 %v238, %v424
    %v640 = vadd.s32 %v239, %v424
    %v641 = vadd.s32 %v240, %v424
    %v642 = vadd.s32 %v241, %v424
    %v643 = vadd.s32 %v242, %v424
    %v644 = vadd.s32 %v243, %v424
    %v645 = vadd.s32 %v244, %v424
    %v646 = vadd.s32 %v245, %v424
    %v647 = vadd.s32 %v246, %v424
    %v648 = vadd.s32 %v247, %v424
    %v649 = vadd.s32 %v248, %v424
    %v650 = vadd.s32 %v249, %v424
    %v651 = vadd.s32 %v250, %v424
    %v652 = vadd.s32 %v251, %v424
    %v653 = vadd.s32 %v252, %v424
    %v654 = vadd.s32 %v253, %v424
    %v655 = vadd.s32 %v254, %v424
    %v656 = vadd.s32 %v255, %v424
    %v657 = vadd.s32 %v256, %v424
    %v658 = vadd.s32 %v257, %v424
    %v659 = vadd.s32 %v258, %v424
    %v660 = vadd.s32 %v259, %v424
    %v661 = vadd.s32 %v260, %v424
    %v662 = vadd.s32 %v261, %v424
    %v663 = vadd.s32 %v262, %v424
    %v664 = vadd.s32 %v263, %v424
    %v665 = vadd.s32 %v264, %v424
    %v666 = vadd.s32 %v265, %v424
    %v667 = vadd.s32 %v266, %v424
    %v668 = vadd.s32 %v267, %v424
    %v669 = vadd.s32 %v268, %v424
    %v670 = vadd.s32 %v269, %v424
    %v671 = vadd.s32 %v270, %v424
    %v672 = vadd.s32 %v271, %v424
    %v673 = vadd.s32 %v272, %v424
    %v674 = vadd.s32 %v273, %v424
    %v675 = vadd.s32 %v274, %v424
    %v676 = vadd.s32 %v275, %v424
    %v677 = vadd.s32 %v276, %v424
    %v678 = vadd.s32 %v277, %v424
    %v679 = vadd.s32 %v278, %v424
    %v680 = vadd.s32 %v279, %v424
    %v681 = vadd.s32 %v280, %v424
    %v682 = vadd.s32 %v281, %v424
    %v683 = vadd.s32 %v282, %v424
    %v684 = vadd.s32 %v283, %v424
    %v685 = vadd.s32 %v284, %v424
    %v686 = vadd.s32 %v285, %v424
    %v687 = vadd.s32 %v286, %v424
    %v688 = vadd.s32 %v287, %v424
    %v689 = vadd.s32 %v288, %v424
    %v690 = vadd.s32 %v289, %v424
    %v691 = vadd.s32 %v290, %v424
    %v692 = vadd.s32 %v291, %v424
    %v693 = vadd.s32 %v292, %v424
    %v694 = vadd.s32 %v293, %v424
    %v695 = vadd.s32 %v294, %v424
    %v696 = vadd.s32 %v295, %v424
    %v697 = vadd.s32 %v296, %v424
    %v698 = vadd.s32 %v297, %v424
    %v699 = vadd.s32 %v298, %v424
    %v700 = vadd.s32 %v299, %v424
    %v701 = vadd.s32 %v300, %v424
    %v702 = vadd.s32 %v301, %v424
    %v703 = vadd.s32 %v302, %v424
    %v704 = vadd.s32 %v303, %v424
    %v705 = vadd.s32 %v304, %v424
    %v706 = vadd.s32 %v305, %v424
    %v707 = vadd.s32 %v306, %v424
    %v708 = vadd.s32 %v307, %v424
    %v709 = vadd.s32 %v308, %v424
    %v710 = vadd.s32 %v309, %v424
    %v711 = vadd.s32 %v310, %v424
    %v712 = vadd.s32 %v311, %v424
    %v713 = vadd.s32 %v312, %v424
    %v714 = vadd.s32 %v313, %v424
    %v715 = vadd.s32 %v314, %v424
    %v716 = vadd.s32 %v315, %v424
    %v717 = vadd.s32 %v316, %v424
    %v718 = vadd.s32 %v317, %v424
    %v719 = vadd.s32 %v318, %v424
    %v720 = vadd.s32 %v319, %v424
    %v721 = vadd.s32 %v320, %v424
    %v722 = vadd.s32 %v321, %v424
    %v723 = vadd.s32 %v322, %v424
    %v724 = vadd.s32 %v323, %v424
    %v725 = vadd.s32 %v324, %v424
    %v726 = vadd.s32 %v325, %v424
    %v727 = vadd.s32 %v326, %v424
    %v728 = vadd.s32 %v327, %v424
    %v729 = vadd.s32 %v328, %v424
    %v730 = vadd.s32 %v329, %v424
    %v731 = vadd.s32 %v330, %v424
    %v732 = vadd.s32 %v331, %v424
    %v733 = vadd.s32 %v332, %v424
    %v734 = vadd.s32 %v333, %v424
    %v735 = vadd.s32 %v334, %v424
    %v736 = vadd.s32 %v335, %v424
    %v737 = vadd.s32 %v336, %v424
    %v738 = vadd.s32 %v337, %v424
    %v739 = vadd.s32 %v338, %v424
    %v740 = vadd.s32 %v339, %v424
    %v741 = vadd.s32 %v340, %v424
    %v742 = vadd.s32 %v341, %v424
    %v743 = vadd.s32 %v342, %v424
    %v744 = vadd.s32 %v343, %v424
    %v745 = vadd.s32 %v344, %v424
    %v746 = vadd.s32 %v345, %v424
    %v747 = vadd.s32 %v346, %v424
    %v748 = vadd.s32 %v347, %v424
    %v749 = vadd.s32 %v348, %v424
    %v750 = vadd.s32 %v349, %v424
    %v751 = vadd.s32 %v350, %v424
    %v752 = vadd.s32 %v351, %v424
    %v753 = vadd.s32 %v352, %v424
    %v754 = vadd.s32 %v353, %v424
    %v755 = vadd.s32 %v354, %v424
    %v756 = vadd.s32 %v355, %v424
    %v757 = vadd.s32 %v356, %v424
    %v758 = vadd.s32 %v357, %v424
    %v759 = vadd.s32 %v358, %v424
    %v760 = vadd.s32 %v359, %v424
    %v761 = vadd.s32 %v360, %v424
    %v762 = vadd.s32 %v361, %v424
    %v763 = vadd.s32 %v362, %v424
    %v764 = vadd.s32 %v363, %v424
    %v765 = vadd.s32 %v364, %v424
    %v766 = vadd.s32 %v365, %v424
    %v767 = vadd.s32 %v366, %v424
    %v768 = vadd.s32 %v367, %v424
    %v769 = vadd.s32 %v368, %v424
    %v770 = vadd.s32 %v369, %v424
    %v771 = vadd.s32 %v370, %v424
    %v772 = vadd.s32 %v371, %v424
    %v773 = vadd.s32 %v372, %v424
    %v774 = vadd.s32 %v373, %v424
    %v775 = vadd.s32 %v374, %v424
    %v776 = vadd.s32 %v375, %v424
    %v777 = vadd.s32 %v376, %v424
    %v778 = vadd.s32 %v377, %v424
    %v779 = vadd.s32 %v378, %v424
    %v780 = vadd.s32 %v379, %v424
    %v781 = vadd.s32 %v380, %v424
    %v782 = vadd.s32 %v381, %v424
    %v783 = vadd.s32 %v382, %v424
    %v784 = vadd.s32 %v383, %v424
    %v785 = vadd.s32 %v384, %v424
    %v786 = vadd.s32 %v385, %v424
    %v787 = vadd.s32 %v386, %v424
    %v788 = vadd.s32 %v387, %v424
    %v789 = vadd.s32 %v388, %v424
    %v790 = vadd.s32 %v389, %v424
    %v791 = vadd.s32 %v390, %v424
    %v792 = vadd.s32 %v391, %v424
    %v793 = vadd.s32 %v392, %v424
    %v794 = vadd.s32 %v393, %v424
    %v795 = vadd.s32 %v394, %v424
    %v796 = vadd.s32 %v395, %v424
    %v797 = vadd.s32 %v396, %v424
    %v798 = vadd.s32 %v397, %v424
    %v799 = vadd.s32 %v398, %v424
    %v800 = vadd.s32 %v399, %v424
    %v801 = vadd.s32 %v400, %v424
    %v802 = vadd.s32 %v401, %v424
    %v803 = vadd.s32 %v402, %v424
    %v804 = vadd.s32 %v403, %v424
    %v805 = vadd.s32 %v404, %v424
    %v806 = vadd.s32 %v405, %v424
    %v807 = vadd.s32 %v406, %v424
    %v808 = vadd.s32 %v407, %v424
    %v809 = vadd.s32 %v408, %v424
    %v810 = vadd.s32 %v409, %v424
    %v811 = vadd.s32 %v410, %v424
    %v812 = vadd.s32 %v411, %v424
    %v813 = vadd.s32 %v412, %v424
    %v814 = vadd.s32 %v413, %v424
    %v815 = vadd.s32 %v414, %v424
    %v816 = vadd.s32 %v415, %v424
    %v817 = vadd.s32 %v416, %v424
    %v818 = vadd.s32 %v417, %v424
    %v819 = vadd.s32 %v418, %v424
    %v820 = vadd.s32 %v419, %v424
    %v821 = vadd.s32 %v420, %v424
    %v822 = vadd.s32 %v421, %v424
    %v823 = vadd.s32 %v422, %v424
    %v824 = vadd.s32 %v423, %v424
    %825 = vst [vmem:[#allocation5] sm:$0xff] %v425
    %826 = vst [vmem:[#allocation5 + $0x8] sm:$0xff] %v426
    %827 = vst [vmem:[#allocation5 + $0x10] sm:$0xff] %v427
    %828 = vst [vmem:[#allocation5 + $0x18] sm:$0xff] %v428
    %829 = vst [vmem:[#allocation5 + $0x20] sm:$0xff] %v429
    %830 = vst [vmem:[#allocation5 + $0x28] sm:$0xff] %v430
    %831 = vst [vmem:[#allocation5 + $0x30] sm:$0xff] %v431
    %832 = vst [vmem:[#allocation5 + $0x38] sm:$0xff] %v432
    %833 = vst [vmem:[#allocation5 + $0x40] sm:$0xff] %v433
    %834 = vst [vmem:[#allocation5 + $0x48] sm:$0xff] %v434
    %835 = vst [vmem:[#allocation5 + $0x50] sm:$0xff] %v435
    %836 = vst [vmem:[#allocation5 + $0x58] sm:$0xff] %v436
    %837 = vst [vmem:[#allocation5 + $0x60] sm:$0xff] %v437
    %838 = vst [vmem:[#allocation5 + $0x68] sm:$0xff] %v438
    %839 = vst [vmem:[#allocation5 + $0x70] sm:$0xff] %v439
    %840 = vst [vmem:[#allocation5 + $0x78] sm:$0xff] %v440
    %841 = vst [vmem:[#allocation5 + $0x80] sm:$0xff] %v441
    %842 = vst [vmem:[#allocation5 + $0x88] sm:$0xff] %v442
    %843 = vst [vmem:[#allocation5 + $0x90] sm:$0xff] %v443
    %844 = vst [vmem:[#allocation5 + $0x98] sm:$0xff] %v444
    %845 = vst [vmem:[#allocation5 + $0xa0] sm:$0xff] %v445
    %846 = vst [vmem:[#allocation5 + $0xa8] sm:$0xff] %v446
    %847 = vst [vmem:[#allocation5 + $0xb0] sm:$0xff] %v447
    %848 = vst [vmem:[#allocation5 + $0xb8] sm:$0xff] %v448
    %849 = vst [vmem:[#allocation5 + $0xc0] sm:$0xff] %v449
    %850 = vst [vmem:[#allocation5 + $0xc8] sm:$0xff] %v450
    %851 = vst [vmem:[#allocation5 + $0xd0] sm:$0xff] %v451
    %852 = vst [vmem:[#allocation5 + $0xd8] sm:$0xff] %v452
    %853 = vst [vmem:[#allocation5 + $0xe0] sm:$0xff] %v453
    %854 = vst [vmem:[#allocation5 + $0xe8] sm:$0xff] %v454
    %855 = vst [vmem:[#allocation5 + $0xf0] sm:$0xff] %v455
    %856 = vst [vmem:[#allocation5 + $0xf8] sm:$0xff] %v456
    %857 = vst [vmem:[#allocation5 + $0x100] sm:$0xff] %v457
    %858 = vst [vmem:[#allocation5 + $0x108] sm:$0xff] %v458
    %859 = vst [vmem:[#allocation5 + $0x110] sm:$0xff] %v459
    %860 = vst [vmem:[#allocation5 + $0x118] sm:$0xff] %v460
    %861 = vst [vmem:[#allocation5 + $0x120] sm:$0xff] %v461
    %862 = vst [vmem:[#allocation5 + $0x128] sm:$0xff] %v462
    %863 = vst [vmem:[#allocation5 + $0x130] sm:$0xff] %v463
    %864 = vst [vmem:[#allocation5 + $0x138] sm:$0xff] %v464
    %865 = vst [vmem:[#allocation5 + $0x140] sm:$0xff] %v465
    %866 = vst [vmem:[#allocation5 + $0x148] sm:$0xff] %v466
    %867 = vst [vmem:[#allocation5 + $0x150] sm:$0xff] %v467
    %868 = vst [vmem:[#allocation5 + $0x158] sm:$0xff] %v468
    %869 = vst [vmem:[#allocation5 + $0x160] sm:$0xff] %v469
    %870 = vst [vmem:[#allocation5 + $0x168] sm:$0xff] %v470
    %871 = vst [vmem:[#allocation5 + $0x170] sm:$0xff] %v471
    %872 = vst [vmem:[#allocation5 + $0x178] sm:$0xff] %v472
    %873 = vst [vmem:[#allocation5 + $0x180] sm:$0xff] %v473
    %874 = vst [vmem:[#allocation5 + $0x188] sm:$0xff] %v474
    %875 = vst [vmem:[#allocation5 + $0x190] sm:$0xff] %v475
    %876 = vst [vmem:[#allocation5 + $0x198] sm:$0xff] %v476
    %877 = vst [vmem:[#allocation5 + $0x1a0] sm:$0xff] %v477
    %878 = vst [vmem:[#allocation5 + $0x1a8] sm:$0xff] %v478
    %879 = vst [vmem:[#allocation5 + $0x1b0] sm:$0xff] %v479
    %880 = vst [vmem:[#allocation5 + $0x1b8] sm:$0xff] %v480
    %881 = vst [vmem:[#allocation5 + $0x1c0] sm:$0xff] %v481
    %882 = vst [vmem:[#allocation5 + $0x1c8] sm:$0xff] %v482
    %883 = vst [vmem:[#allocation5 + $0x1d0] sm:$0xff] %v483
    %884 = vst [vmem:[#allocation5 + $0x1d8] sm:$0xff] %v484
    %885 = vst [vmem:[#allocation5 + $0x1e0] sm:$0xff] %v485
    %886 = vst [vmem:[#allocation5 + $0x1e8] sm:$0xff] %v486
    %887 = vst [vmem:[#allocation5 + $0x1f0] sm:$0xff] %v487
    %888 = vst [vmem:[#allocation5 + $0x1f8] sm:$0xff] %v488
    %889 = vst [vmem:[#allocation5 + $0x200] sm:$0xff] %v489
    %890 = vst [vmem:[#allocation5 + $0x208] sm:$0xff] %v490
    %891 = vst [vmem:[#allocation5 + $0x210] sm:$0xff] %v491
    %892 = vst [vmem:[#allocation5 + $0x218] sm:$0xff] %v492
    %893 = vst [vmem:[#allocation5 + $0x220] sm:$0xff] %v493
    %894 = vst [vmem:[#allocation5 + $0x228] sm:$0xff] %v494
    %895 = vst [vmem:[#allocation5 + $0x230] sm:$0xff] %v495
    %896 = vst [vmem:[#allocation5 + $0x238] sm:$0xff] %v496
    %897 = vst [vmem:[#allocation5 + $0x240] sm:$0xff] %v497
    %898 = vst [vmem:[#allocation5 + $0x248] sm:$0xff] %v498
    %899 = vst [vmem:[#allocation5 + $0x250] sm:$0xff] %v499
    %900 = vst [vmem:[#allocation5 + $0x258] sm:$0xff] %v500
    %901 = vst [vmem:[#allocation5 + $0x260] sm:$0xff] %v501
    %902 = vst [vmem:[#allocation5 + $0x268] sm:$0xff] %v502
    %903 = vst [vmem:[#allocation5 + $0x270] sm:$0xff] %v503
    %904 = vst [vmem:[#allocation5 + $0x278] sm:$0xff] %v504
    %905 = vst [vmem:[#allocation5 + $0x280] sm:$0xff] %v505
    %906 = vst [vmem:[#allocation5 + $0x288] sm:$0xff] %v506
    %907 = vst [vmem:[#allocation5 + $0x290] sm:$0xff] %v507
    %908 = vst [vmem:[#allocation5 + $0x298] sm:$0xff] %v508
    %909 = vst [vmem:[#allocation5 + $0x2a0] sm:$0xff] %v509
    %910 = vst [vmem:[#allocation5 + $0x2a8] sm:$0xff] %v510
    %911 = vst [vmem:[#allocation5 + $0x2b0] sm:$0xff] %v511
    %912 = vst [vmem:[#allocation5 + $0x2b8] sm:$0xff] %v512
    %913 = vst [vmem:[#allocation5 + $0x2c0] sm:$0xff] %v513
    %914 = vst [vmem:[#allocation5 + $0x2c8] sm:$0xff] %v514
    %915 = vst [vmem:[#allocation5 + $0x2d0] sm:$0xff] %v515
    %916 = vst [vmem:[#allocation5 + $0x2d8] sm:$0xff] %v516
    %917 = vst [vmem:[#allocation5 + $0x2e0] sm:$0xff] %v517
    %918 = vst [vmem:[#allocation5 + $0x2e8] sm:$0xff] %v518
    %919 = vst [vmem:[#allocation5 + $0x2f0] sm:$0xff] %v519
    %920 = vst [vmem:[#allocation5 + $0x2f8] sm:$0xff] %v520
    %921 = vst [vmem:[#allocation5 + $0x300] sm:$0xff] %v521
    %922 = vst [vmem:[#allocation5 + $0x308] sm:$0xff] %v522
    %923 = vst [vmem:[#allocation5 + $0x310] sm:$0xff] %v523
    %924 = vst [vmem:[#allocation5 + $0x318] sm:$0xff] %v524
    %925 = vst [vmem:[#allocation5 + $0x320] sm:$0xff] %v525
    %926 = vst [vmem:[#allocation5 + $0x328] sm:$0xff] %v526
    %927 = vst [vmem:[#allocation5 + $0x330] sm:$0xff] %v527
    %928 = vst [vmem:[#allocation5 + $0x338] sm:$0xff] %v528
    %929 = vst [vmem:[#allocation5 + $0x340] sm:$0xff] %v529
    %930 = vst [vmem:[#allocation5 + $0x348] sm:$0xff] %v530
    %931 = vst [vmem:[#allocation5 + $0x350] sm:$0xff] %v531
    %932 = vst [vmem:[#allocation5 + $0x358] sm:$0xff] %v532
    %933 = vst [vmem:[#allocation5 + $0x360] sm:$0xff] %v533
    %934 = vst [vmem:[#allocation5 + $0x368] sm:$0xff] %v534
    %935 = vst [vmem:[#allocation5 + $0x370] sm:$0xff] %v535
    %936 = vst [vmem:[#allocation5 + $0x378] sm:$0xff] %v536
    %937 = vst [vmem:[#allocation5 + $0x380] sm:$0xff] %v537
    %938 = vst [vmem:[#allocation5 + $0x388] sm:$0xff] %v538
    %939 = vst [vmem:[#allocation5 + $0x390] sm:$0xff] %v539
    %940 = vst [vmem:[#allocation5 + $0x398] sm:$0xff] %v540
    %941 = vst [vmem:[#allocation5 + $0x3a0] sm:$0xff] %v541
    %942 = vst [vmem:[#allocation5 + $0x3a8] sm:$0xff] %v542
    %943 = vst [vmem:[#allocation5 + $0x3b0] sm:$0xff] %v543
    %944 = vst [vmem:[#allocation5 + $0x3b8] sm:$0xff] %v544
    %945 = vst [vmem:[#allocation5 + $0x3c0] sm:$0xff] %v545
    %946 = vst [vmem:[#allocation5 + $0x3c8] sm:$0xff] %v546
    %947 = vst [vmem:[#allocation5 + $0x3d0] sm:$0xff] %v547
    %948 = vst [vmem:[#allocation5 + $0x3d8] sm:$0xff] %v548
    %949 = vst [vmem:[#allocation5 + $0x3e0] sm:$0xff] %v549
    %950 = vst [vmem:[#allocation5 + $0x3e8] sm:$0xff] %v550
    %951 = vst [vmem:[#allocation5 + $0x3f0] sm:$0xff] %v551
    %952 = vst [vmem:[#allocation5 + $0x3f8] sm:$0xff] %v552
    %953 = vst [vmem:[#allocation5 + $0x400] sm:$0xff] %v553
    %954 = vst [vmem:[#allocation5 + $0x408] sm:$0xff] %v554
    %955 = vst [vmem:[#allocation5 + $0x410] sm:$0xff] %v555
    %956 = vst [vmem:[#allocation5 + $0x418] sm:$0xff] %v556
    %957 = vst [vmem:[#allocation5 + $0x420] sm:$0xff] %v557
    %958 = vst [vmem:[#allocation5 + $0x428] sm:$0xff] %v558
    %959 = vst [vmem:[#allocation5 + $0x430] sm:$0xff] %v559
    %960 = vst [vmem:[#allocation5 + $0x438] sm:$0xff] %v560
    %961 = vst [vmem:[#allocation5 + $0x440] sm:$0xff] %v561
    %962 = vst [vmem:[#allocation5 + $0x448] sm:$0xff] %v562
    %963 = vst [vmem:[#allocation5 + $0x450] sm:$0xff] %v563
    %964 = vst [vmem:[#allocation5 + $0x458] sm:$0xff] %v564
    %965 = vst [vmem:[#allocation5 + $0x460] sm:$0xff] %v565
    %966 = vst [vmem:[#allocation5 + $0x468] sm:$0xff] %v566
    %967 = vst [vmem:[#allocation5 + $0x470] sm:$0xff] %v567
    %968 = vst [vmem:[#allocation5 + $0x478] sm:$0xff] %v568
    %969 = vst [vmem:[#allocation5 + $0x480] sm:$0xff] %v569
    %970 = vst [vmem:[#allocation5 + $0x488] sm:$0xff] %v570
    %971 = vst [vmem:[#allocation5 + $0x490] sm:$0xff] %v571
    %972 = vst [vmem:[#allocation5 + $0x498] sm:$0xff] %v572
    %973 = vst [vmem:[#allocation5 + $0x4a0] sm:$0xff] %v573
    %974 = vst [vmem:[#allocation5 + $0x4a8] sm:$0xff] %v574
    %975 = vst [vmem:[#allocation5 + $0x4b0] sm:$0xff] %v575
    %976 = vst [vmem:[#allocation5 + $0x4b8] sm:$0xff] %v576
    %977 = vst [vmem:[#allocation5 + $0x4c0] sm:$0xff] %v577
    %978 = vst [vmem:[#allocation5 + $0x4c8] sm:$0xff] %v578
    %979 = vst [vmem:[#allocation5 + $0x4d0] sm:$0xff] %v579
    %980 = vst [vmem:[#allocation5 + $0x4d8] sm:$0xff] %v580
    %981 = vst [vmem:[#allocation5 + $0x4e0] sm:$0xff] %v581
    %982 = vst [vmem:[#allocation5 + $0x4e8] sm:$0xff] %v582
    %983 = vst [vmem:[#allocation5 + $0x4f0] sm:$0xff] %v583
    %984 = vst [vmem:[#allocation5 + $0x4f8] sm:$0xff] %v584
    %985 = vst [vmem:[#allocation5 + $0x500] sm:$0xff] %v585
    %986 = vst [vmem:[#allocation5 + $0x508] sm:$0xff] %v586
    %987 = vst [vmem:[#allocation5 + $0x510] sm:$0xff] %v587
    %988 = vst [vmem:[#allocation5 + $0x518] sm:$0xff] %v588
    %989 = vst [vmem:[#allocation5 + $0x520] sm:$0xff] %v589
    %990 = vst [vmem:[#allocation5 + $0x528] sm:$0xff] %v590
    %991 = vst [vmem:[#allocation5 + $0x530] sm:$0xff] %v591
    %992 = vst [vmem:[#allocation5 + $0x538] sm:$0xff] %v592
    %993 = vst [vmem:[#allocation5 + $0x540] sm:$0xff] %v593
    %994 = vst [vmem:[#allocation5 + $0x548] sm:$0xff] %v594
    %995 = vst [vmem:[#allocation5 + $0x550] sm:$0xff] %v595
    %996 = vst [vmem:[#allocation5 + $0x558] sm:$0xff] %v596
    %997 = vst [vmem:[#allocation5 + $0x560] sm:$0xff] %v597
    %998 = vst [vmem:[#allocation5 + $0x568] sm:$0xff] %v598
    %999 = vst [vmem:[#allocation5 + $0x570] sm:$0xff] %v599
    %1000 = vst [vmem:[#allocation5 + $0x578] sm:$0xff] %v600
    %1001 = vst [vmem:[#allocation5 + $0x580] sm:$0xff] %v601
    %1002 = vst [vmem:[#allocation5 + $0x588] sm:$0xff] %v602
    %1003 = vst [vmem:[#allocation5 + $0x590] sm:$0xff] %v603
    %1004 = vst [vmem:[#allocation5 + $0x598] sm:$0xff] %v604
    %1005 = vst [vmem:[#allocation5 + $0x5a0] sm:$0xff] %v605
    %1006 = vst [vmem:[#allocation5 + $0x5a8] sm:$0xff] %v606
    %1007 = vst [vmem:[#allocation5 + $0x5b0] sm:$0xff] %v607
    %1008 = vst [vmem:[#allocation5 + $0x5b8] sm:$0xff] %v608
    %1009 = vst [vmem:[#allocation5 + $0x5c0] sm:$0xff] %v609
    %1010 = vst [vmem:[#allocation5 + $0x5c8] sm:$0xff] %v610
    %1011 = vst [vmem:[#allocation5 + $0x5d0] sm:$0xff] %v611
    %1012 = vst [vmem:[#allocation5 + $0x5d8] sm:$0xff] %v612
    %1013 = vst [vmem:[#allocation5 + $0x5e0] sm:$0xff] %v613
    %1014 = vst [vmem:[#allocation5 + $0x5e8] sm:$0xff] %v614
    %1015 = vst [vmem:[#allocation5 + $0x5f0] sm:$0xff] %v615
    %1016 = vst [vmem:[#allocation5 + $0x5f8] sm:$0xff] %v616
    %1017 = vst [vmem:[#allocation5 + $0x600] sm:$0xff] %v617
    %1018 = vst [vmem:[#allocation5 + $0x608] sm:$0xff] %v618
    %1019 = vst [vmem:[#allocation5 + $0x610] sm:$0xff] %v619
    %1020 = vst [vmem:[#allocation5 + $0x618] sm:$0xff] %v620
    %1021 = vst [vmem:[#allocation5 + $0x620] sm:$0xff] %v621
    %1022 = vst [vmem:[#allocation5 + $0x628] sm:$0xff] %v622
    %1023 = vst [vmem:[#allocation5 + $0x630] sm:$0xff] %v623
    %1024 = vst [vmem:[#allocation5 + $0x638] sm:$0xff] %v624
    %1025 = vst [vmem:[#allocation5 + $0x640] sm:$0xff] %v625
    %1026 = vst [vmem:[#allocation5 + $0x648] sm:$0xff] %v626
    %1027 = vst [vmem:[#allocation5 + $0x650] sm:$0xff] %v627
    %1028 = vst [vmem:[#allocation5 + $0x658] sm:$0xff] %v628
    %1029 = vst [vmem:[#allocation5 + $0x660] sm:$0xff] %v629
    %1030 = vst [vmem:[#allocation5 + $0x668] sm:$0xff] %v630
    %1031 = vst [vmem:[#allocation5 + $0x670] sm:$0xff] %v631
    %1032 = vst [vmem:[#allocation5 + $0x678] sm:$0xff] %v632
    %1033 = vst [vmem:[#allocation5 + $0x680] sm:$0xff] %v633
    %1034 = vst [vmem:[#allocation5 + $0x688] sm:$0xff] %v634
    %1035 = vst [vmem:[#allocation5 + $0x690] sm:$0xff] %v635
    %1036 = vst [vmem:[#allocation5 + $0x698] sm:$0xff] %v636
    %1037 = vst [vmem:[#allocation5 + $0x6a0] sm:$0xff] %v637
    %1038 = vst [vmem:[#allocation5 + $0x6a8] sm:$0xff] %v638
    %1039 = vst [vmem:[#allocation5 + $0x6b0] sm:$0xff] %v639
    %1040 = vst [vmem:[#allocation5 + $0x6b8] sm:$0xff] %v640
    %1041 = vst [vmem:[#allocation5 + $0x6c0] sm:$0xff] %v641
    %1042 = vst [vmem:[#allocation5 + $0x6c8] sm:$0xff] %v642
    %1043 = vst [vmem:[#allocation5 + $0x6d0] sm:$0xff] %v643
    %1044 = vst [vmem:[#allocation5 + $0x6d8] sm:$0xff] %v644
    %1045 = vst [vmem:[#allocation5 + $0x6e0] sm:$0xff] %v645
    %1046 = vst [vmem:[#allocation5 + $0x6e8] sm:$0xff] %v646
    %1047 = vst [vmem:[#allocation5 + $0x6f0] sm:$0xff] %v647
    %1048 = vst [vmem:[#allocation5 + $0x6f8] sm:$0xff] %v648
    %1049 = vst [vmem:[#allocation5 + $0x700] sm:$0xff] %v649
    %1050 = vst [vmem:[#allocation5 + $0x708] sm:$0xff] %v650
    %1051 = vst [vmem:[#allocation5 + $0x710] sm:$0xff] %v651
    %1052 = vst [vmem:[#allocation5 + $0x718] sm:$0xff] %v652
    %1053 = vst [vmem:[#allocation5 + $0x720] sm:$0xff] %v653
    %1054 = vst [vmem:[#allocation5 + $0x728] sm:$0xff] %v654
    %1055 = vst [vmem:[#allocation5 + $0x730] sm:$0xff] %v655
    %1056 = vst [vmem:[#allocation5 + $0x738] sm:$0xff] %v656
    %1057 = vst [vmem:[#allocation5 + $0x740] sm:$0xff] %v657
    %1058 = vst [vmem:[#allocation5 + $0x748] sm:$0xff] %v658
    %1059 = vst [vmem:[#allocation5 + $0x750] sm:$0xff] %v659
    %1060 = vst [vmem:[#allocation5 + $0x758] sm:$0xff] %v660
    %1061 = vst [vmem:[#allocation5 + $0x760] sm:$0xff] %v661
    %1062 = vst [vmem:[#allocation5 + $0x768] sm:$0xff] %v662
    %1063 = vst [vmem:[#allocation5 + $0x770] sm:$0xff] %v663
    %1064 = vst [vmem:[#allocation5 + $0x778] sm:$0xff] %v664
    %1065 = vst [vmem:[#allocation5 + $0x780] sm:$0xff] %v665
    %1066 = vst [vmem:[#allocation5 + $0x788] sm:$0xff] %v666
    %1067 = vst [vmem:[#allocation5 + $0x790] sm:$0xff] %v667
    %1068 = vst [vmem:[#allocation5 + $0x798] sm:$0xff] %v668
    %1069 = vst [vmem:[#allocation5 + $0x7a0] sm:$0xff] %v669
    %1070 = vst [vmem:[#allocation5 + $0x7a8] sm:$0xff] %v670
    %1071 = vst [vmem:[#allocation5 + $0x7b0] sm:$0xff] %v671
    %1072 = vst [vmem:[#allocation5 + $0x7b8] sm:$0xff] %v672
    %1073 = vst [vmem:[#allocation5 + $0x7c0] sm:$0xff] %v673
    %1074 = vst [vmem:[#allocation5 + $0x7c8] sm:$0xff] %v674
    %1075 = vst [vmem:[#allocation5 + $0x7d0] sm:$0xff] %v675
    %1076 = vst [vmem:[#allocation5 + $0x7d8] sm:$0xff] %v676
    %1077 = vst [vmem:[#allocation5 + $0x7e0] sm:$0xff] %v677
    %1078 = vst [vmem:[#allocation5 + $0x7e8] sm:$0xff] %v678
    %1079 = vst [vmem:[#allocation5 + $0x7f0] sm:$0xff] %v679
    %1080 = vst [vmem:[#allocation5 + $0x7f8] sm:$0xff] %v680
    %1081 = vst [vmem:[#allocation5 + $0x800] sm:$0xff] %v681
    %1082 = vst [vmem:[#allocation5 + $0x808] sm:$0xff] %v682
    %1083 = vst [vmem:[#allocation5 + $0x810] sm:$0xff] %v683
    %1084 = vst [vmem:[#allocation5 + $0x818] sm:$0xff] %v684
    %1085 = vst [vmem:[#allocation5 + $0x820] sm:$0xff] %v685
    %1086 = vst [vmem:[#allocation5 + $0x828] sm:$0xff] %v686
    %1087 = vst [vmem:[#allocation5 + $0x830] sm:$0xff] %v687
    %1088 = vst [vmem:[#allocation5 + $0x838] sm:$0xff] %v688
    %1089 = vst [vmem:[#allocation5 + $0x840] sm:$0xff] %v689
    %1090 = vst [vmem:[#allocation5 + $0x848] sm:$0xff] %v690
    %1091 = vst [vmem:[#allocation5 + $0x850] sm:$0xff] %v691
    %1092 = vst [vmem:[#allocation5 + $0x858] sm:$0xff] %v692
    %1093 = vst [vmem:[#allocation5 + $0x860] sm:$0xff] %v693
    %1094 = vst [vmem:[#allocation5 + $0x868] sm:$0xff] %v694
    %1095 = vst [vmem:[#allocation5 + $0x870] sm:$0xff] %v695
    %1096 = vst [vmem:[#allocation5 + $0x878] sm:$0xff] %v696
    %1097 = vst [vmem:[#allocation5 + $0x880] sm:$0xff] %v697
    %1098 = vst [vmem:[#allocation5 + $0x888] sm:$0xff] %v698
    %1099 = vst [vmem:[#allocation5 + $0x890] sm:$0xff] %v699
    %1100 = vst [vmem:[#allocation5 + $0x898] sm:$0xff] %v700
    %1101 = vst [vmem:[#allocation5 + $0x8a0] sm:$0xff] %v701
    %1102 = vst [vmem:[#allocation5 + $0x8a8] sm:$0xff] %v702
    %1103 = vst [vmem:[#allocation5 + $0x8b0] sm:$0xff] %v703
    %1104 = vst [vmem:[#allocation5 + $0x8b8] sm:$0xff] %v704
    %1105 = vst [vmem:[#allocation5 + $0x8c0] sm:$0xff] %v705
    %1106 = vst [vmem:[#allocation5 + $0x8c8] sm:$0xff] %v706
    %1107 = vst [vmem:[#allocation5 + $0x8d0] sm:$0xff] %v707
    %1108 = vst [vmem:[#allocation5 + $0x8d8] sm:$0xff] %v708
    %1109 = vst [vmem:[#allocation5 + $0x8e0] sm:$0xff] %v709
    %1110 = vst [vmem:[#allocation5 + $0x8e8] sm:$0xff] %v710
    %1111 = vst [vmem:[#allocation5 + $0x8f0] sm:$0xff] %v711
    %1112 = vst [vmem:[#allocation5 + $0x8f8] sm:$0xff] %v712
    %1113 = vst [vmem:[#allocation5 + $0x900] sm:$0xff] %v713
    %1114 = vst [vmem:[#allocation5 + $0x908] sm:$0xff] %v714
    %1115 = vst [vmem:[#allocation5 + $0x910] sm:$0xff] %v715
    %1116 = vst [vmem:[#allocation5 + $0x918] sm:$0xff] %v716
    %1117 = vst [vmem:[#allocation5 + $0x920] sm:$0xff] %v717
    %1118 = vst [vmem:[#allocation5 + $0x928] sm:$0xff] %v718
    %1119 = vst [vmem:[#allocation5 + $0x930] sm:$0xff] %v719
    %1120 = vst [vmem:[#allocation5 + $0x938] sm:$0xff] %v720
    %1121 = vst [vmem:[#allocation5 + $0x940] sm:$0xff] %v721
    %1122 = vst [vmem:[#allocation5 + $0x948] sm:$0xff] %v722
    %1123 = vst [vmem:[#allocation5 + $0x950] sm:$0xff] %v723
    %1124 = vst [vmem:[#allocation5 + $0x958] sm:$0xff] %v724
    %1125 = vst [vmem:[#allocation5 + $0x960] sm:$0xff] %v725
    %1126 = vst [vmem:[#allocation5 + $0x968] sm:$0xff] %v726
    %1127 = vst [vmem:[#allocation5 + $0x970] sm:$0xff] %v727
    %1128 = vst [vmem:[#allocation5 + $0x978] sm:$0xff] %v728
    %1129 = vst [vmem:[#allocation5 + $0x980] sm:$0xff] %v729
    %1130 = vst [vmem:[#allocation5 + $0x988] sm:$0xff] %v730
    %1131 = vst [vmem:[#allocation5 + $0x990] sm:$0xff] %v731
    %1132 = vst [vmem:[#allocation5 + $0x998] sm:$0xff] %v732
    %1133 = vst [vmem:[#allocation5 + $0x9a0] sm:$0xff] %v733
    %1134 = vst [vmem:[#allocation5 + $0x9a8] sm:$0xff] %v734
    %1135 = vst [vmem:[#allocation5 + $0x9b0] sm:$0xff] %v735
    %1136 = vst [vmem:[#allocation5 + $0x9b8] sm:$0xff] %v736
    %1137 = vst [vmem:[#allocation5 + $0x9c0] sm:$0xff] %v737
    %1138 = vst [vmem:[#allocation5 + $0x9c8] sm:$0xff] %v738
    %1139 = vst [vmem:[#allocation5 + $0x9d0] sm:$0xff] %v739
    %1140 = vst [vmem:[#allocation5 + $0x9d8] sm:$0xff] %v740
    %1141 = vst [vmem:[#allocation5 + $0x9e0] sm:$0xff] %v741
    %1142 = vst [vmem:[#allocation5 + $0x9e8] sm:$0xff] %v742
    %1143 = vst [vmem:[#allocation5 + $0x9f0] sm:$0xff] %v743
    %1144 = vst [vmem:[#allocation5 + $0x9f8] sm:$0xff] %v744
    %1145 = vst [vmem:[#allocation5 + $0xa00] sm:$0xff] %v745
    %1146 = vst [vmem:[#allocation5 + $0xa08] sm:$0xff] %v746
    %1147 = vst [vmem:[#allocation5 + $0xa10] sm:$0xff] %v747
    %1148 = vst [vmem:[#allocation5 + $0xa18] sm:$0xff] %v748
    %1149 = vst [vmem:[#allocation5 + $0xa20] sm:$0xff] %v749
    %1150 = vst [vmem:[#allocation5 + $0xa28] sm:$0xff] %v750
    %1151 = vst [vmem:[#allocation5 + $0xa30] sm:$0xff] %v751
    %1152 = vst [vmem:[#allocation5 + $0xa38] sm:$0xff] %v752
    %1153 = vst [vmem:[#allocation5 + $0xa40] sm:$0xff] %v753
    %1154 = vst [vmem:[#allocation5 + $0xa48] sm:$0xff] %v754
    %1155 = vst [vmem:[#allocation5 + $0xa50] sm:$0xff] %v755
    %1156 = vst [vmem:[#allocation5 + $0xa58] sm:$0xff] %v756
    %1157 = vst [vmem:[#allocation5 + $0xa60] sm:$0xff] %v757
    %1158 = vst [vmem:[#allocation5 + $0xa68] sm:$0xff] %v758
    %1159 = vst [vmem:[#allocation5 + $0xa70] sm:$0xff] %v759
    %1160 = vst [vmem:[#allocation5 + $0xa78] sm:$0xff] %v760
    %1161 = vst [vmem:[#allocation5 + $0xa80] sm:$0xff] %v761
    %1162 = vst [vmem:[#allocation5 + $0xa88] sm:$0xff] %v762
    %1163 = vst [vmem:[#allocation5 + $0xa90] sm:$0xff] %v763
    %1164 = vst [vmem:[#allocation5 + $0xa98] sm:$0xff] %v764
    %1165 = vst [vmem:[#allocation5 + $0xaa0] sm:$0xff] %v765
    %1166 = vst [vmem:[#allocation5 + $0xaa8] sm:$0xff] %v766
    %1167 = vst [vmem:[#allocation5 + $0xab0] sm:$0xff] %v767
    %1168 = vst [vmem:[#allocation5 + $0xab8] sm:$0xff] %v768
    %1169 = vst [vmem:[#allocation5 + $0xac0] sm:$0xff] %v769
    %1170 = vst [vmem:[#allocation5 + $0xac8] sm:$0xff] %v770
    %1171 = vst [vmem:[#allocation5 + $0xad0] sm:$0xff] %v771
    %1172 = vst [vmem:[#allocation5 + $0xad8] sm:$0xff] %v772
    %1173 = vst [vmem:[#allocation5 + $0xae0] sm:$0xff] %v773
    %1174 = vst [vmem:[#allocation5 + $0xae8] sm:$0xff] %v774
    %1175 = vst [vmem:[#allocation5 + $0xaf0] sm:$0xff] %v775
    %1176 = vst [vmem:[#allocation5 + $0xaf8] sm:$0xff] %v776
    %1177 = vst [vmem:[#allocation5 + $0xb00] sm:$0xff] %v777
    %1178 = vst [vmem:[#allocation5 + $0xb08] sm:$0xff] %v778
    %1179 = vst [vmem:[#allocation5 + $0xb10] sm:$0xff] %v779
    %1180 = vst [vmem:[#allocation5 + $0xb18] sm:$0xff] %v780
    %1181 = vst [vmem:[#allocation5 + $0xb20] sm:$0xff] %v781
    %1182 = vst [vmem:[#allocation5 + $0xb28] sm:$0xff] %v782
    %1183 = vst [vmem:[#allocation5 + $0xb30] sm:$0xff] %v783
    %1184 = vst [vmem:[#allocation5 + $0xb38] sm:$0xff] %v784
    %1185 = vst [vmem:[#allocation5 + $0xb40] sm:$0xff] %v785
    %1186 = vst [vmem:[#allocation5 + $0xb48] sm:$0xff] %v786
    %1187 = vst [vmem:[#allocation5 + $0xb50] sm:$0xff] %v787
    %1188 = vst [vmem:[#allocation5 + $0xb58] sm:$0xff] %v788
    %1189 = vst [vmem:[#allocation5 + $0xb60] sm:$0xff] %v789
    %1190 = vst [vmem:[#allocation5 + $0xb68] sm:$0xff] %v790
    %1191 = vst [vmem:[#allocation5 + $0xb70] sm:$0xff] %v791
    %1192 = vst [vmem:[#allocation5 + $0xb78] sm:$0xff] %v792
    %1193 = vst [vmem:[#allocation5 + $0xb80] sm:$0xff] %v793
    %1194 = vst [vmem:[#allocation5 + $0xb88] sm:$0xff] %v794
    %1195 = vst [vmem:[#allocation5 + $0xb90] sm:$0xff] %v795
    %1196 = vst [vmem:[#allocation5 + $0xb98] sm:$0xff] %v796
    %1197 = vst [vmem:[#allocation5 + $0xba0] sm:$0xff] %v797
    %1198 = vst [vmem:[#allocation5 + $0xba8] sm:$0xff] %v798
    %1199 = vst [vmem:[#allocation5 + $0xbb0] sm:$0xff] %v799
    %1200 = vst [vmem:[#allocation5 + $0xbb8] sm:$0xff] %v800
    %1201 = vst [vmem:[#allocation5 + $0xbc0] sm:$0xff] %v801
    %1202 = vst [vmem:[#allocation5 + $0xbc8] sm:$0xff] %v802
    %1203 = vst [vmem:[#allocation5 + $0xbd0] sm:$0xff] %v803
    %1204 = vst [vmem:[#allocation5 + $0xbd8] sm:$0xff] %v804
    %1205 = vst [vmem:[#allocation5 + $0xbe0] sm:$0xff] %v805
    %1206 = vst [vmem:[#allocation5 + $0xbe8] sm:$0xff] %v806
    %1207 = vst [vmem:[#allocation5 + $0xbf0] sm:$0xff] %v807
    %1208 = vst [vmem:[#allocation5 + $0xbf8] sm:$0xff] %v808
    %1209 = vst [vmem:[#allocation5 + $0xc00] sm:$0xff] %v809
    %1210 = vst [vmem:[#allocation5 + $0xc08] sm:$0xff] %v810
    %1211 = vst [vmem:[#allocation5 + $0xc10] sm:$0xff] %v811
    %1212 = vst [vmem:[#allocation5 + $0xc18] sm:$0xff] %v812
    %1213 = vst [vmem:[#allocation5 + $0xc20] sm:$0xff] %v813
    %1214 = vst [vmem:[#allocation5 + $0xc28] sm:$0xff] %v814
    %1215 = vst [vmem:[#allocation5 + $0xc30] sm:$0xff] %v815
    %1216 = vst [vmem:[#allocation5 + $0xc38] sm:$0xff] %v816
    %1217 = vst [vmem:[#allocation5 + $0xc40] sm:$0xff] %v817
    %1218 = vst [vmem:[#allocation5 + $0xc48] sm:$0xff] %v818
    %1219 = vst [vmem:[#allocation5 + $0xc50] sm:$0xff] %v819
    %1220 = vst [vmem:[#allocation5 + $0xc58] sm:$0xff] %v820
    %1221 = vst [vmem:[#allocation5 + $0xc60] sm:$0xff] %v821
    %1222 = vst [vmem:[#allocation5 + $0xc68] sm:$0xff] %v822
    %1223 = vst [vmem:[#allocation5 + $0xc70] sm:$0xff] %v823
    %1224 = vst [vmem:[#allocation5 + $0xc78] sm:$0xff] %v824
    // Predicated region
    $region10: #{tpu_custom_call.1} parent=1 // pred_check
      _
    $region11: #{tpu_custom_call.1} parent=1 // pred_check_branch
      %1226 = sbr.rel (0) target = $region13
    $region12: #{tpu_custom_call.1} parent=1 // pred_region
      %s1228 = ssub.s32 51200, 51200
      %1229 = vsyncadd [#allocation4], %s1228
      %s1230 = sshll.u32 [#allocation5], 4
      %s1231 = int_to_ptr.vmem [resolvable:$true] %s1230
      %1236 = dma.vmem_to_hbm [thread:$0]  %s1231, 51200, %s1, [#allocation4], 512, 512, 32
    $region13: #{tpu_custom_call.1} parent=1 // pred_fallthru
      _
    // Predicated region
    $region14: #{tpu_custom_call.1} parent=1 // pred_check
      _
    $region15: #{tpu_custom_call.1} parent=1 // pred_check_branch
      %1238 = sbr.rel (0) target = $region17
    $region16: #{tpu_custom_call.1} parent=1 // pred_region
      %1239 = dma.done [#allocation4], 51200
    $region17: #{tpu_custom_call.1} parent=1 // pred_fallthru
      _
    %1240 = vsyncpa [#allocation3], 1
    %1241 = vsyncpa [#allocation4], 1

</llo_original>
